<compile_context>
chip_gen: v6e
topology: v6e:2x2x1
jax: 0.10.0
libtpu: 0.0.40
codegen_flags: <defaults>
</compile_context>

<pallas_src>
import functools

import jax
import jax.numpy as jnp
from jax.experimental import pallas as pl
from jax.experimental.pallas import tpu as pltpu


def _bottleneck_kernel(x_ref, w1_ref, b1_ref, w2_ref, b2_ref, w3_ref, b3_ref,
                       m_ref, o_ref, stacked_ref, *, width, cp, nb):
    """One grid step: NB batch images, full bottleneck block each."""
    # Hoist weight / bias / mask loads out of the unrolled batch loop.
    w1 = w1_ref[...]            # (Cp, Cin)   bf16
    w2 = w2_ref[...]            # (Cp, 9*Cp)  bf16
    w3 = w3_ref[...]            # (Cout, Cp)  bf16
    b1 = b1_ref[...]            # (Cp, 1)     f32
    b2 = b2_ref[...]            # (Cp, 1)     f32
    b3 = b3_ref[...]            # (Cout, 1)   f32
    m = m_ref[...]              # (9, HW)     f32 tap-validity masks
    hw = x_ref.shape[-1]

    for b in range(nb):                                   # static unroll
        # ---- conv1 (1x1) + folded-BN bias + ReLU ----
        h = jnp.dot(w1, x_ref[b].astype(jnp.bfloat16),
                    preferred_element_type=jnp.float32)
        h = jnp.maximum(h + b1, 0.0)                      # (Cp, HW) f32

        # ---- conv2 (3x3, stride 1, pad 1) as ONE K=9*Cp matmul: lane-rolled,
        #      border-masked taps written piecewise into the bf16 im2col
        #      scratch (no concatenate, no second full-pass cast) ----
        for kh in range(3):
            for kw in range(3):
                k = kh * 3 + kw
                s = (kh - 1) * width + (kw - 1)           # flattened tap shift
                if s == 0:
                    piece = h.astype(jnp.bfloat16)        # center tap, no mask
                else:
                    rolled = pltpu.roll(h, (-s) % hw, axis=1)   # XLU rotate
                    piece = (rolled * m[k:k + 1, :]).astype(jnp.bfloat16)
                stacked_ref[pl.ds(k * cp, cp), :] = piece
        h2 = jnp.dot(w2, stacked_ref[...], preferred_element_type=jnp.float32)
        h2 = jnp.maximum(h2 + b2, 0.0)                    # (Cp, HW) f32

        # ---- conv3 (1x1) + folded-BN bias + f32 residual + ReLU ----
        h3 = jnp.dot(w3, h2.astype(jnp.bfloat16),
                     preferred_element_type=jnp.float32)
        h3 = h3 + b3 + x_ref[b]                           # f32 identity add
        o_ref[b] = jnp.maximum(h3, 0.0).astype(o_ref.dtype)


def _pick_batch_block(n, cin, cout, cp, hw, vmem_budget_bytes):
    """Largest batch sub-block whose per-step VMEM residents fit the budget."""
    def per_step_bytes(nb):
        x_io = 2 * nb * cin * hw * 4       # double-buffered f32 input block
        o_io = 2 * nb * cout * hw * 4      # double-buffered f32 output block
        scratch = 9 * cp * hw * 2          # bf16 im2col operand (reused)
        acts = 2 * cp * hw * 4             # h / h2 f32 live values
        weights = (cp * cin + cp * 9 * cp + cout * cp) * 2 + 9 * hw * 4
        return x_io + o_io + scratch + acts + weights

    divisors = [d for d in range(1, n + 1) if n % d == 0]
    nb = 1
    for d in divisors:
        if per_step_bytes(d) <= vmem_budget_bytes:
            nb = d
    # v7x has 2 TensorCores: when the grid keeps more than one step, prefer an
    # even step count so the "parallel" batch axis splits evenly across cores.
    if (n // nb) > 1 and (n // nb) % 2 == 1:
        for d in reversed(divisors):
            if d <= nb and (n // d) % 2 == 0:
                nb = d
                break
    return nb


def block_forward(x_nchw, w1, s1, b1, w2, s2, b2, w3, s3, b3,
                  *, batch_block=None, out_dtype=jnp.float32):
    """Fused bottleneck block (eval-mode BN folded into the convolutions).

    x_nchw: (N, Cin, H, W) float32 (PyTorch layout).
    w1: (Cmid, Cin, 1, 1), w2: (Cmid, Cmid, 3, 3), w3: (Cout, Cmid, 1, 1)
        in PyTorch OIHW layout.
    s*/b*: per-channel eval-mode BatchNorm scale / bias (1-D).

    Call under jax.jit with the weights closed over as constants so the BN
    folding / zero-padding / mask construction below constant-folds.
    """
    N, Cin, H, W = x_nchw.shape
    Cmid = w1.shape[0]
    Cout = w3.shape[0]
    HW = H * W
    assert w1.shape == (Cmid, Cin, 1, 1)
    assert w2.shape == (Cmid, Cmid, 3, 3)
    assert w3.shape == (Cout, Cmid, 1, 1)
    # Default module path (no identity_downsample, stride=1) requires this.
    assert Cin == Cout, "identity shortcut needs in_channels == 4*intermediate"

    # Pad the intermediate channel count to a multiple of 16 so every bf16
    # piece written into the (9*Cp, HW) im2col scratch is tile-aligned.
    Cp = ((Cmid + 15) // 16) * 16

    f32 = jnp.float32
    bf16 = jnp.bfloat16
    # Fold BN scales into the conv weights (eval-mode constants), cast bf16.
    w1s = w1[:, :, 0, 0].astype(f32) * s1[:, None]                  # (Cmid, Cin)
    w1m = jnp.zeros((Cp, Cin), f32).at[:Cmid].set(w1s).astype(bf16)
    b1c = jnp.zeros((Cp, 1), f32).at[:Cmid, 0].set(b1)

    w2s = w2.astype(f32) * s2[:, None, None, None]                  # (O, I, 3, 3)
    w2p = jnp.zeros((Cp, 3, 3, Cp), f32)
    w2p = w2p.at[:Cmid, :, :, :Cmid].set(jnp.transpose(w2s, (0, 2, 3, 1)))
    w2m = w2p.reshape(Cp, 9 * Cp).astype(bf16)                      # (Cp, 9*Cp)
    b2c = jnp.zeros((Cp, 1), f32).at[:Cmid, 0].set(b2)

    w3s = w3[:, :, 0, 0].astype(f32) * s3[:, None]                  # (Cout, Cmid)
    w3m = jnp.zeros((Cout, Cp), f32).at[:, :Cmid].set(w3s).astype(bf16)
    b3c = b3.reshape(Cout, 1).astype(f32)

    # Spatial-validity masks for the 9 taps of the padded 3x3 conv (zero where
    # the tap would read outside the image == the implicit zero padding).
    rows = jnp.arange(H).reshape(H, 1)
    cols = jnp.arange(W).reshape(1, W)
    masks = []
    for kh in range(3):
        for kw in range(3):
            di, dj = kh - 1, kw - 1
            valid = ((rows + di >= 0) & (rows + di < H) &
                     (cols + dj >= 0) & (cols + dj < W))
            masks.append(valid.reshape(HW))
    mask = jnp.stack(masks, axis=0).astype(f32)                     # (9, HW)

    # Channels-first, flattened spatial on the lane axis: just NCHW reshaped,
    # kept in f32 (no wrapper cast pass; the kernel casts the matmul operand
    # and uses the f32 copy for the identity add).
    x2 = x_nchw.reshape(N, Cin, HW)

    vmem_limit = 32 * 1024 * 1024
    if batch_block is None:
        batch_block = _pick_batch_block(N, Cin, Cout, Cp, HW,
                                        vmem_budget_bytes=vmem_limit // 2)
    NB = batch_block
    assert N % NB == 0

    kernel = functools.partial(_bottleneck_kernel, width=W, cp=Cp, nb=NB)

    def full(a):
        return pl.BlockSpec(a.shape, lambda g: (0,) * a.ndim)

    out = pl.pallas_call(
        kernel,
        out_shape=jax.ShapeDtypeStruct((N, Cout, HW), out_dtype),
        grid=(N // NB,),
        in_specs=[
            pl.BlockSpec((NB, Cin, HW), lambda g: (g, 0, 0)),
            full(w1m), full(b1c),
            full(w2m), full(b2c),
            full(w3m), full(b3c),
            full(mask),
        ],
        out_specs=pl.BlockSpec((NB, Cout, HW), lambda g: (g, 0, 0)),
        scratch_shapes=[pltpu.VMEM((9 * Cp, HW), bf16)],
        compiler_params=pltpu.CompilerParams(
            dimension_semantics=("parallel",),
            vmem_limit_bytes=vmem_limit),
    )(x2, w1m, b1c, w2m, b2c, w3m, b3c, mask)
    return out.reshape(N, Cout, H, W)


def _block_ref_nchw(x, w1, s1, b1, w2, s2, b2, w3, s3, b3):
    """Pure-JAX f32 reference mirroring the PyTorch module (NCHW / OIHW)."""
    dn = ('NCHW', 'OIHW', 'NCHW')

    def bn(v, s, b):
        return v * s[None, :, None, None] + b[None, :, None, None]

    h = jnp.maximum(bn(jax.lax.conv_general_dilated(
        x, w1, (1, 1), 'VALID', dimension_numbers=dn), s1, b1), 0.0)
    h2 = jnp.maximum(bn(jax.lax.conv_general_dilated(
        h, w2, (1, 1), 'SAME', dimension_numbers=dn), s2, b2), 0.0)
    h3 = bn(jax.lax.conv_general_dilated(
        h2, w3, (1, 1), 'VALID', dimension_numbers=dn), s3, b3)
    return jnp.maximum(h3 + x, 0.0)


if __name__ == "__main__":
    key = jax.random.PRNGKey(0)
    N, Cin, H, W = 2, 16, 16, 16
    Cmid = 4
    Cout = Cmid * 4            # == Cin so the identity shortcut adds directly
    keys = jax.random.split(key, 16)

    x = jax.random.normal(keys[0], (N, Cin, H, W), jnp.float32)
    w1 = 0.1 * jax.random.normal(keys[1], (Cmid, Cin, 1, 1), jnp.float32)
    w2 = 0.1 * jax.random.normal(keys[2], (Cmid, Cmid, 3, 3), jnp.float32)
    w3 = 0.1 * jax.random.normal(keys[3], (Cout, Cmid, 1, 1), jnp.float32)

    def bn_fold(kg, kb, km, kv, C, eps=1e-5):
        gamma = 1.0 + 0.1 * jax.random.normal(kg, (C,), jnp.float32)
        beta = 0.1 * jax.random.normal(kb, (C,), jnp.float32)
        mean = 0.1 * jax.random.normal(km, (C,), jnp.float32)
        var = jnp.abs(jax.random.normal(kv, (C,), jnp.float32)) + 0.5
        scale = gamma / jnp.sqrt(var + eps)
        bias = beta - mean * scale
        return scale, bias

    s1, b1 = bn_fold(keys[4], keys[5], keys[6], keys[7], Cmid)
    s2, b2 = bn_fold(keys[8], keys[9], keys[10], keys[11], Cmid)
    s3, b3 = bn_fold(keys[12], keys[13], keys[14], keys[15], Cout)

    # jit with the weights closed over as constants so all wrapper prep
    # (BN folding, weight padding, mask construction) constant-folds.
    fwd = jax.jit(lambda xx: block_forward(
        xx, w1, s1, b1, w2, s2, b2, w3, s3, b3))
    out = fwd(x)
    jax.block_until_ready(out)

    ref = _block_ref_nchw(x, w1, s1, b1, w2, s2, b2, w3, s3, b3)
    assert out.shape == (N, Cout, H, W)
    max_err = float(jnp.max(jnp.abs(out - ref)))
    # bf16 matmul operands with f32 accumulation (and a pure-f32 identity add)
    # vs the pure-f32 reference.
    assert jnp.allclose(out, ref, atol=5e-2, rtol=5e-2), max_err

    print("KERNEL_OK")
</pallas_src>

<mosaic_0001>
module attributes {stable_mosaic.version = 11 : i64} {
  func.func @_bottleneck_kernel(%arg0: i32, %arg1: memref<2x16x256xf32, #tpu.memory_space<vmem>>, %arg2: memref<16x16xbf16, #tpu.memory_space<vmem>>, %arg3: memref<16x1xf32, #tpu.memory_space<vmem>>, %arg4: memref<16x144xbf16, #tpu.memory_space<vmem>>, %arg5: memref<16x1xf32, #tpu.memory_space<vmem>>, %arg6: memref<16x16xbf16, #tpu.memory_space<vmem>>, %arg7: memref<16x1xf32, #tpu.memory_space<vmem>>, %arg8: memref<9x256xf32, #tpu.memory_space<vmem>>, %arg9: memref<2x16x256xf32, #tpu.memory_space<vmem>>, %arg10: memref<144x256xbf16, #tpu.memory_space<vmem>>) attributes {dimension_semantics = [#tpu.dimension_semantics<parallel>], iteration_bounds = array<i64: 1>, scalar_prefetch = 0 : i64, scratch_operands = 1 : i64, tpu.core_type = #tpu.core_type<tc>, window_params = [{transform_indices = @transform_0, window_bounds = array<i64: 2, 16, 256>}, {pipeline_mode = #tpu.pipeline_mode<synchronous>, transform_indices = @transform_1, window_bounds = array<i64: 16, 16>}, {pipeline_mode = #tpu.pipeline_mode<synchronous>, transform_indices = @transform_2, window_bounds = array<i64: 16, 1>}, {pipeline_mode = #tpu.pipeline_mode<synchronous>, transform_indices = @transform_3, window_bounds = array<i64: 16, 144>}, {pipeline_mode = #tpu.pipeline_mode<synchronous>, transform_indices = @transform_4, window_bounds = array<i64: 16, 1>}, {pipeline_mode = #tpu.pipeline_mode<synchronous>, transform_indices = @transform_5, window_bounds = array<i64: 16, 16>}, {pipeline_mode = #tpu.pipeline_mode<synchronous>, transform_indices = @transform_6, window_bounds = array<i64: 16, 1>}, {pipeline_mode = #tpu.pipeline_mode<synchronous>, transform_indices = @transform_7, window_bounds = array<i64: 9, 256>}, {transform_indices = @transform_8, window_bounds = array<i64: 2, 16, 256>}]} {
    %c0 = arith.constant 0 : index
    %c0_0 = arith.constant 0 : index
    %0 = vector.load %arg2[%c0, %c0_0] : memref<16x16xbf16, #tpu.memory_space<vmem>>, vector<16x16xbf16>
    %c0_1 = arith.constant 0 : index
    %c0_2 = arith.constant 0 : index
    %1 = vector.load %arg4[%c0_1, %c0_2] : memref<16x144xbf16, #tpu.memory_space<vmem>>, vector<16x144xbf16>
    %c0_3 = arith.constant 0 : index
    %c0_4 = arith.constant 0 : index
    %2 = vector.load %arg6[%c0_3, %c0_4] : memref<16x16xbf16, #tpu.memory_space<vmem>>, vector<16x16xbf16>
    %c0_5 = arith.constant 0 : index
    %c0_6 = arith.constant 0 : index
    %3 = vector.load %arg3[%c0_5, %c0_6] : memref<16x1xf32, #tpu.memory_space<vmem>>, vector<16x1xf32>
    %c0_7 = arith.constant 0 : index
    %c0_8 = arith.constant 0 : index
    %4 = vector.load %arg5[%c0_7, %c0_8] : memref<16x1xf32, #tpu.memory_space<vmem>>, vector<16x1xf32>
    %c0_9 = arith.constant 0 : index
    %c0_10 = arith.constant 0 : index
    %5 = vector.load %arg7[%c0_9, %c0_10] : memref<16x1xf32, #tpu.memory_space<vmem>>, vector<16x1xf32>
    %c0_11 = arith.constant 0 : index
    %c0_12 = arith.constant 0 : index
    %6 = vector.load %arg8[%c0_11, %c0_12] : memref<9x256xf32, #tpu.memory_space<vmem>>, vector<9x256xf32>
    %c0_13 = arith.constant 0 : index
    %c0_14 = arith.constant 0 : index
    %c0_15 = arith.constant 0 : index
    %7 = vector.load %arg1[%c0_13, %c0_14, %c0_15] : memref<2x16x256xf32, #tpu.memory_space<vmem>>, vector<1x16x256xf32>
    %8 = vector.shape_cast %7 : vector<1x16x256xf32> to vector<16x256xf32>
    %9 = arith.truncf %8 : vector<16x256xf32> to vector<16x256xbf16>
    %cst = arith.constant dense<0.000000e+00> : vector<16x256xf32>
    %10 = tpu.matmul %0, %9, %cst {dimension_numbers = #tpu.dot_dimension_numbers<[1], [0], [0], [1], [0, 0, 1, 1], [], []>} : vector<16x16xbf16>, vector<16x256xbf16>, vector<16x256xf32> -> vector<16x256xf32>
    %11 = vector.broadcast %3 : vector<16x1xf32> to vector<16x256xf32>
    %12 = arith.addf %10, %11 : vector<16x256xf32>
    %cst_16 = arith.constant 0.000000e+00 : f32
    %13 = vector.broadcast %cst_16 : f32 to vector<16x256xf32>
    %14 = arith.maximumf %12, %13 : vector<16x256xf32>
    %c17_i32 = arith.constant 17 : i32
    %15 = tpu.dynamic_rotate %14 by %c17_i32 dim 1 : vector<16x256xf32>, i32 -> vector<16x256xf32>
    %16 = vector.extract_strided_slice %6 {offsets = [0, 0], sizes = [1, 256], strides = [1, 1]} : vector<9x256xf32> to vector<1x256xf32>
    %17 = vector.broadcast %16 : vector<1x256xf32> to vector<16x256xf32>
    %18 = arith.mulf %15, %17 : vector<16x256xf32>
    %19 = arith.truncf %18 : vector<16x256xf32> to vector<16x256xbf16>
    %c0_17 = arith.constant 0 : index
    %c0_18 = arith.constant 0 : index
    %20 = vector.load %arg10[%c0_17, %c0_18] : memref<144x256xbf16, #tpu.memory_space<vmem>>, vector<16x256xbf16>
    tpu.vector_store %arg10[%c0_17, %c0_18], %19 {strides = array<i32>} : memref<144x256xbf16, #tpu.memory_space<vmem>>, vector<16x256xbf16>,
    %c16_i32 = arith.constant 16 : i32
    %21 = tpu.dynamic_rotate %14 by %c16_i32 dim 1 : vector<16x256xf32>, i32 -> vector<16x256xf32>
    %22 = vector.extract_strided_slice %6 {offsets = [1, 0], sizes = [1, 256], strides = [1, 1]} : vector<9x256xf32> to vector<1x256xf32>
    %23 = vector.broadcast %22 : vector<1x256xf32> to vector<16x256xf32>
    %24 = arith.mulf %21, %23 : vector<16x256xf32>
    %25 = arith.truncf %24 : vector<16x256xf32> to vector<16x256xbf16>
    %c16 = arith.constant 16 : index
    %c0_19 = arith.constant 0 : index
    %26 = vector.load %arg10[%c16, %c0_19] : memref<144x256xbf16, #tpu.memory_space<vmem>>, vector<16x256xbf16>
    tpu.vector_store %arg10[%c16, %c0_19], %25 {strides = array<i32>} : memref<144x256xbf16, #tpu.memory_space<vmem>>, vector<16x256xbf16>,
    %c15_i32 = arith.constant 15 : i32
    %27 = tpu.dynamic_rotate %14 by %c15_i32 dim 1 : vector<16x256xf32>, i32 -> vector<16x256xf32>
    %28 = vector.extract_strided_slice %6 {offsets = [2, 0], sizes = [1, 256], strides = [1, 1]} : vector<9x256xf32> to vector<1x256xf32>
    %29 = vector.broadcast %28 : vector<1x256xf32> to vector<16x256xf32>
    %30 = arith.mulf %27, %29 : vector<16x256xf32>
    %31 = arith.truncf %30 : vector<16x256xf32> to vector<16x256xbf16>
    %c32 = arith.constant 32 : index
    %c0_20 = arith.constant 0 : index
    %32 = vector.load %arg10[%c32, %c0_20] : memref<144x256xbf16, #tpu.memory_space<vmem>>, vector<16x256xbf16>
    tpu.vector_store %arg10[%c32, %c0_20], %31 {strides = array<i32>} : memref<144x256xbf16, #tpu.memory_space<vmem>>, vector<16x256xbf16>,
    %c1_i32 = arith.constant 1 : i32
    %33 = tpu.dynamic_rotate %14 by %c1_i32 dim 1 : vector<16x256xf32>, i32 -> vector<16x256xf32>
    %34 = vector.extract_strided_slice %6 {offsets = [3, 0], sizes = [1, 256], strides = [1, 1]} : vector<9x256xf32> to vector<1x256xf32>
    %35 = vector.broadcast %34 : vector<1x256xf32> to vector<16x256xf32>
    %36 = arith.mulf %33, %35 : vector<16x256xf32>
    %37 = arith.truncf %36 : vector<16x256xf32> to vector<16x256xbf16>
    %c48 = arith.constant 48 : index
    %c0_21 = arith.constant 0 : index
    %38 = vector.load %arg10[%c48, %c0_21] : memref<144x256xbf16, #tpu.memory_space<vmem>>, vector<16x256xbf16>
    tpu.vector_store %arg10[%c48, %c0_21], %37 {strides = array<i32>} : memref<144x256xbf16, #tpu.memory_space<vmem>>, vector<16x256xbf16>,
    %39 = arith.truncf %14 : vector<16x256xf32> to vector<16x256xbf16>
    %c64 = arith.constant 64 : index
    %c0_22 = arith.constant 0 : index
    %40 = vector.load %arg10[%c64, %c0_22] : memref<144x256xbf16, #tpu.memory_space<vmem>>, vector<16x256xbf16>
    tpu.vector_store %arg10[%c64, %c0_22], %39 {strides = array<i32>} : memref<144x256xbf16, #tpu.memory_space<vmem>>, vector<16x256xbf16>,
    %c255_i32 = arith.constant 255 : i32
    %41 = tpu.dynamic_rotate %14 by %c255_i32 dim 1 : vector<16x256xf32>, i32 -> vector<16x256xf32>
    %42 = vector.extract_strided_slice %6 {offsets = [5, 0], sizes = [1, 256], strides = [1, 1]} : vector<9x256xf32> to vector<1x256xf32>
    %43 = vector.broadcast %42 : vector<1x256xf32> to vector<16x256xf32>
    %44 = arith.mulf %41, %43 : vector<16x256xf32>
    %45 = arith.truncf %44 : vector<16x256xf32> to vector<16x256xbf16>
    %c80 = arith.constant 80 : index
    %c0_23 = arith.constant 0 : index
    %46 = vector.load %arg10[%c80, %c0_23] : memref<144x256xbf16, #tpu.memory_space<vmem>>, vector<16x256xbf16>
    tpu.vector_store %arg10[%c80, %c0_23], %45 {strides = array<i32>} : memref<144x256xbf16, #tpu.memory_space<vmem>>, vector<16x256xbf16>,
    %c241_i32 = arith.constant 241 : i32
    %47 = tpu.dynamic_rotate %14 by %c241_i32 dim 1 : vector<16x256xf32>, i32 -> vector<16x256xf32>
    %48 = vector.extract_strided_slice %6 {offsets = [6, 0], sizes = [1, 256], strides = [1, 1]} : vector<9x256xf32> to vector<1x256xf32>
    %49 = vector.broadcast %48 : vector<1x256xf32> to vector<16x256xf32>
    %50 = arith.mulf %47, %49 : vector<16x256xf32>
    %51 = arith.truncf %50 : vector<16x256xf32> to vector<16x256xbf16>
    %c96 = arith.constant 96 : index
    %c0_24 = arith.constant 0 : index
    %52 = vector.load %arg10[%c96, %c0_24] : memref<144x256xbf16, #tpu.memory_space<vmem>>, vector<16x256xbf16>
    tpu.vector_store %arg10[%c96, %c0_24], %51 {strides = array<i32>} : memref<144x256xbf16, #tpu.memory_space<vmem>>, vector<16x256xbf16>,
    %c240_i32 = arith.constant 240 : i32
    %53 = tpu.dynamic_rotate %14 by %c240_i32 dim 1 : vector<16x256xf32>, i32 -> vector<16x256xf32>
    %54 = vector.extract_strided_slice %6 {offsets = [7, 0], sizes = [1, 256], strides = [1, 1]} : vector<9x256xf32> to vector<1x256xf32>
    %55 = vector.broadcast %54 : vector<1x256xf32> to vector<16x256xf32>
    %56 = arith.mulf %53, %55 : vector<16x256xf32>
    %57 = arith.truncf %56 : vector<16x256xf32> to vector<16x256xbf16>
    %c112 = arith.constant 112 : index
    %c0_25 = arith.constant 0 : index
    %58 = vector.load %arg10[%c112, %c0_25] : memref<144x256xbf16, #tpu.memory_space<vmem>>, vector<16x256xbf16>
    tpu.vector_store %arg10[%c112, %c0_25], %57 {strides = array<i32>} : memref<144x256xbf16, #tpu.memory_space<vmem>>, vector<16x256xbf16>,
    %c239_i32 = arith.constant 239 : i32
    %59 = tpu.dynamic_rotate %14 by %c239_i32 dim 1 : vector<16x256xf32>, i32 -> vector<16x256xf32>
    %60 = vector.extract_strided_slice %6 {offsets = [8, 0], sizes = [1, 256], strides = [1, 1]} : vector<9x256xf32> to vector<1x256xf32>
    %61 = vector.broadcast %60 : vector<1x256xf32> to vector<16x256xf32>
    %62 = arith.mulf %59, %61 : vector<16x256xf32>
    %63 = arith.truncf %62 : vector<16x256xf32> to vector<16x256xbf16>
    %c128 = arith.constant 128 : index
    %c0_26 = arith.constant 0 : index
    %64 = vector.load %arg10[%c128, %c0_26] : memref<144x256xbf16, #tpu.memory_space<vmem>>, vector<16x256xbf16>
    tpu.vector_store %arg10[%c128, %c0_26], %63 {strides = array<i32>} : memref<144x256xbf16, #tpu.memory_space<vmem>>, vector<16x256xbf16>,
    %c0_27 = arith.constant 0 : index
    %c0_28 = arith.constant 0 : index
    %65 = vector.load %arg10[%c0_27, %c0_28] : memref<144x256xbf16, #tpu.memory_space<vmem>>, vector<144x256xbf16>
    %cst_29 = arith.constant dense<0.000000e+00> : vector<16x256xf32>
    %66 = tpu.matmul %1, %65, %cst_29 {dimension_numbers = #tpu.dot_dimension_numbers<[1], [0], [0], [1], [0, 0, 1, 1], [], []>} : vector<16x144xbf16>, vector<144x256xbf16>, vector<16x256xf32> -> vector<16x256xf32>
    %67 = vector.broadcast %4 : vector<16x1xf32> to vector<16x256xf32>
    %68 = arith.addf %66, %67 : vector<16x256xf32>
    %cst_30 = arith.constant 0.000000e+00 : f32
    %69 = vector.broadcast %cst_30 : f32 to vector<16x256xf32>
    %70 = arith.maximumf %68, %69 : vector<16x256xf32>
    %71 = arith.truncf %70 : vector<16x256xf32> to vector<16x256xbf16>
    %cst_31 = arith.constant dense<0.000000e+00> : vector<16x256xf32>
    %72 = tpu.matmul %2, %71, %cst_31 {dimension_numbers = #tpu.dot_dimension_numbers<[1], [0], [0], [1], [0, 0, 1, 1], [], []>} : vector<16x16xbf16>, vector<16x256xbf16>, vector<16x256xf32> -> vector<16x256xf32>
    %73 = vector.broadcast %5 : vector<16x1xf32> to vector<16x256xf32>
    %74 = arith.addf %72, %73 : vector<16x256xf32>
    %c0_32 = arith.constant 0 : index
    %c0_33 = arith.constant 0 : index
    %c0_34 = arith.constant 0 : index
    %75 = vector.load %arg1[%c0_32, %c0_33, %c0_34] : memref<2x16x256xf32, #tpu.memory_space<vmem>>, vector<1x16x256xf32>
    %76 = vector.shape_cast %75 : vector<1x16x256xf32> to vector<16x256xf32>
    %77 = arith.addf %74, %76 : vector<16x256xf32>
    %cst_35 = arith.constant 0.000000e+00 : f32
    %78 = vector.broadcast %cst_35 : f32 to vector<16x256xf32>
    %79 = arith.maximumf %77, %78 : vector<16x256xf32>
    %c0_36 = arith.constant 0 : index
    %c0_37 = arith.constant 0 : index
    %c0_38 = arith.constant 0 : index
    %80 = vector.load %arg9[%c0_36, %c0_37, %c0_38] : memref<2x16x256xf32, #tpu.memory_space<vmem>>, vector<1x16x256xf32>
    %81 = vector.shape_cast %80 : vector<1x16x256xf32> to vector<16x256xf32>
    %82 = vector.shape_cast %79 : vector<16x256xf32> to vector<1x16x256xf32>
    tpu.vector_store %arg9[%c0_36, %c0_37, %c0_38], %82 {strides = array<i32>} : memref<2x16x256xf32, #tpu.memory_space<vmem>>, vector<1x16x256xf32>,
    %c1 = arith.constant 1 : index
    %c0_39 = arith.constant 0 : index
    %c0_40 = arith.constant 0 : index
    %83 = vector.load %arg1[%c1, %c0_39, %c0_40] : memref<2x16x256xf32, #tpu.memory_space<vmem>>, vector<1x16x256xf32>
    %84 = vector.shape_cast %83 : vector<1x16x256xf32> to vector<16x256xf32>
    %85 = arith.truncf %84 : vector<16x256xf32> to vector<16x256xbf16>
    %cst_41 = arith.constant dense<0.000000e+00> : vector<16x256xf32>
    %86 = tpu.matmul %0, %85, %cst_41 {dimension_numbers = #tpu.dot_dimension_numbers<[1], [0], [0], [1], [0, 0, 1, 1], [], []>} : vector<16x16xbf16>, vector<16x256xbf16>, vector<16x256xf32> -> vector<16x256xf32>
    %87 = vector.broadcast %3 : vector<16x1xf32> to vector<16x256xf32>
    %88 = arith.addf %86, %87 : vector<16x256xf32>
    %cst_42 = arith.constant 0.000000e+00 : f32
    %89 = vector.broadcast %cst_42 : f32 to vector<16x256xf32>
    %90 = arith.maximumf %88, %89 : vector<16x256xf32>
    %c17_i32_43 = arith.constant 17 : i32
    %91 = tpu.dynamic_rotate %90 by %c17_i32_43 dim 1 : vector<16x256xf32>, i32 -> vector<16x256xf32>
    %92 = vector.extract_strided_slice %6 {offsets = [0, 0], sizes = [1, 256], strides = [1, 1]} : vector<9x256xf32> to vector<1x256xf32>
    %93 = vector.broadcast %92 : vector<1x256xf32> to vector<16x256xf32>
    %94 = arith.mulf %91, %93 : vector<16x256xf32>
    %95 = arith.truncf %94 : vector<16x256xf32> to vector<16x256xbf16>
    %c0_44 = arith.constant 0 : index
    %c0_45 = arith.constant 0 : index
    %96 = vector.load %arg10[%c0_44, %c0_45] : memref<144x256xbf16, #tpu.memory_space<vmem>>, vector<16x256xbf16>
    tpu.vector_store %arg10[%c0_44, %c0_45], %95 {strides = array<i32>} : memref<144x256xbf16, #tpu.memory_space<vmem>>, vector<16x256xbf16>,
    %c16_i32_46 = arith.constant 16 : i32
    %97 = tpu.dynamic_rotate %90 by %c16_i32_46 dim 1 : vector<16x256xf32>, i32 -> vector<16x256xf32>
    %98 = vector.extract_strided_slice %6 {offsets = [1, 0], sizes = [1, 256], strides = [1, 1]} : vector<9x256xf32> to vector<1x256xf32>
    %99 = vector.broadcast %98 : vector<1x256xf32> to vector<16x256xf32>
    %100 = arith.mulf %97, %99 : vector<16x256xf32>
    %101 = arith.truncf %100 : vector<16x256xf32> to vector<16x256xbf16>
    %c16_47 = arith.constant 16 : index
    %c0_48 = arith.constant 0 : index
    %102 = vector.load %arg10[%c16_47, %c0_48] : memref<144x256xbf16, #tpu.memory_space<vmem>>, vector<16x256xbf16>
    tpu.vector_store %arg10[%c16_47, %c0_48], %101 {strides = array<i32>} : memref<144x256xbf16, #tpu.memory_space<vmem>>, vector<16x256xbf16>,
    %c15_i32_49 = arith.constant 15 : i32
    %103 = tpu.dynamic_rotate %90 by %c15_i32_49 dim 1 : vector<16x256xf32>, i32 -> vector<16x256xf32>
    %104 = vector.extract_strided_slice %6 {offsets = [2, 0], sizes = [1, 256], strides = [1, 1]} : vector<9x256xf32> to vector<1x256xf32>
    %105 = vector.broadcast %104 : vector<1x256xf32> to vector<16x256xf32>
    %106 = arith.mulf %103, %105 : vector<16x256xf32>
    %107 = arith.truncf %106 : vector<16x256xf32> to vector<16x256xbf16>
    %c32_50 = arith.constant 32 : index
    %c0_51 = arith.constant 0 : index
    %108 = vector.load %arg10[%c32_50, %c0_51] : memref<144x256xbf16, #tpu.memory_space<vmem>>, vector<16x256xbf16>
    tpu.vector_store %arg10[%c32_50, %c0_51], %107 {strides = array<i32>} : memref<144x256xbf16, #tpu.memory_space<vmem>>, vector<16x256xbf16>,
    %c1_i32_52 = arith.constant 1 : i32
    %109 = tpu.dynamic_rotate %90 by %c1_i32_52 dim 1 : vector<16x256xf32>, i32 -> vector<16x256xf32>
    %110 = vector.extract_strided_slice %6 {offsets = [3, 0], sizes = [1, 256], strides = [1, 1]} : vector<9x256xf32> to vector<1x256xf32>
    %111 = vector.broadcast %110 : vector<1x256xf32> to vector<16x256xf32>
    %112 = arith.mulf %109, %111 : vector<16x256xf32>
    %113 = arith.truncf %112 : vector<16x256xf32> to vector<16x256xbf16>
    %c48_53 = arith.constant 48 : index
    %c0_54 = arith.constant 0 : index
    %114 = vector.load %arg10[%c48_53, %c0_54] : memref<144x256xbf16, #tpu.memory_space<vmem>>, vector<16x256xbf16>
    tpu.vector_store %arg10[%c48_53, %c0_54], %113 {strides = array<i32>} : memref<144x256xbf16, #tpu.memory_space<vmem>>, vector<16x256xbf16>,
    %115 = arith.truncf %90 : vector<16x256xf32> to vector<16x256xbf16>
    %c64_55 = arith.constant 64 : index
    %c0_56 = arith.constant 0 : index
    %116 = vector.load %arg10[%c64_55, %c0_56] : memref<144x256xbf16, #tpu.memory_space<vmem>>, vector<16x256xbf16>
    tpu.vector_store %arg10[%c64_55, %c0_56], %115 {strides = array<i32>} : memref<144x256xbf16, #tpu.memory_space<vmem>>, vector<16x256xbf16>,
    %c255_i32_57 = arith.constant 255 : i32
    %117 = tpu.dynamic_rotate %90 by %c255_i32_57 dim 1 : vector<16x256xf32>, i32 -> vector<16x256xf32>
    %118 = vector.extract_strided_slice %6 {offsets = [5, 0], sizes = [1, 256], strides = [1, 1]} : vector<9x256xf32> to vector<1x256xf32>
    %119 = vector.broadcast %118 : vector<1x256xf32> to vector<16x256xf32>
    %120 = arith.mulf %117, %119 : vector<16x256xf32>
    %121 = arith.truncf %120 : vector<16x256xf32> to vector<16x256xbf16>
    %c80_58 = arith.constant 80 : index
    %c0_59 = arith.constant 0 : index
    %122 = vector.load %arg10[%c80_58, %c0_59] : memref<144x256xbf16, #tpu.memory_space<vmem>>, vector<16x256xbf16>
    tpu.vector_store %arg10[%c80_58, %c0_59], %121 {strides = array<i32>} : memref<144x256xbf16, #tpu.memory_space<vmem>>, vector<16x256xbf16>,
    %c241_i32_60 = arith.constant 241 : i32
    %123 = tpu.dynamic_rotate %90 by %c241_i32_60 dim 1 : vector<16x256xf32>, i32 -> vector<16x256xf32>
    %124 = vector.extract_strided_slice %6 {offsets = [6, 0], sizes = [1, 256], strides = [1, 1]} : vector<9x256xf32> to vector<1x256xf32>
    %125 = vector.broadcast %124 : vector<1x256xf32> to vector<16x256xf32>
    %126 = arith.mulf %123, %125 : vector<16x256xf32>
    %127 = arith.truncf %126 : vector<16x256xf32> to vector<16x256xbf16>
    %c96_61 = arith.constant 96 : index
    %c0_62 = arith.constant 0 : index
    %128 = vector.load %arg10[%c96_61, %c0_62] : memref<144x256xbf16, #tpu.memory_space<vmem>>, vector<16x256xbf16>
    tpu.vector_store %arg10[%c96_61, %c0_62], %127 {strides = array<i32>} : memref<144x256xbf16, #tpu.memory_space<vmem>>, vector<16x256xbf16>,
    %c240_i32_63 = arith.constant 240 : i32
    %129 = tpu.dynamic_rotate %90 by %c240_i32_63 dim 1 : vector<16x256xf32>, i32 -> vector<16x256xf32>
    %130 = vector.extract_strided_slice %6 {offsets = [7, 0], sizes = [1, 256], strides = [1, 1]} : vector<9x256xf32> to vector<1x256xf32>
    %131 = vector.broadcast %130 : vector<1x256xf32> to vector<16x256xf32>
    %132 = arith.mulf %129, %131 : vector<16x256xf32>
    %133 = arith.truncf %132 : vector<16x256xf32> to vector<16x256xbf16>
    %c112_64 = arith.constant 112 : index
    %c0_65 = arith.constant 0 : index
    %134 = vector.load %arg10[%c112_64, %c0_65] : memref<144x256xbf16, #tpu.memory_space<vmem>>, vector<16x256xbf16>
    tpu.vector_store %arg10[%c112_64, %c0_65], %133 {strides = array<i32>} : memref<144x256xbf16, #tpu.memory_space<vmem>>, vector<16x256xbf16>,
    %c239_i32_66 = arith.constant 239 : i32
    %135 = tpu.dynamic_rotate %90 by %c239_i32_66 dim 1 : vector<16x256xf32>, i32 -> vector<16x256xf32>
    %136 = vector.extract_strided_slice %6 {offsets = [8, 0], sizes = [1, 256], strides = [1, 1]} : vector<9x256xf32> to vector<1x256xf32>
    %137 = vector.broadcast %136 : vector<1x256xf32> to vector<16x256xf32>
    %138 = arith.mulf %135, %137 : vector<16x256xf32>
    %139 = arith.truncf %138 : vector<16x256xf32> to vector<16x256xbf16>
    %c128_67 = arith.constant 128 : index
    %c0_68 = arith.constant 0 : index
    %140 = vector.load %arg10[%c128_67, %c0_68] : memref<144x256xbf16, #tpu.memory_space<vmem>>, vector<16x256xbf16>
    tpu.vector_store %arg10[%c128_67, %c0_68], %139 {strides = array<i32>} : memref<144x256xbf16, #tpu.memory_space<vmem>>, vector<16x256xbf16>,
    %c0_69 = arith.constant 0 : index
    %c0_70 = arith.constant 0 : index
    %141 = vector.load %arg10[%c0_69, %c0_70] : memref<144x256xbf16, #tpu.memory_space<vmem>>, vector<144x256xbf16>
    %cst_71 = arith.constant dense<0.000000e+00> : vector<16x256xf32>
    %142 = tpu.matmul %1, %141, %cst_71 {dimension_numbers = #tpu.dot_dimension_numbers<[1], [0], [0], [1], [0, 0, 1, 1], [], []>} : vector<16x144xbf16>, vector<144x256xbf16>, vector<16x256xf32> -> vector<16x256xf32>
    %143 = vector.broadcast %4 : vector<16x1xf32> to vector<16x256xf32>
    %144 = arith.addf %142, %143 : vector<16x256xf32>
    %cst_72 = arith.constant 0.000000e+00 : f32
    %145 = vector.broadcast %cst_72 : f32 to vector<16x256xf32>
    %146 = arith.maximumf %144, %145 : vector<16x256xf32>
    %147 = arith.truncf %146 : vector<16x256xf32> to vector<16x256xbf16>
    %cst_73 = arith.constant dense<0.000000e+00> : vector<16x256xf32>
    %148 = tpu.matmul %2, %147, %cst_73 {dimension_numbers = #tpu.dot_dimension_numbers<[1], [0], [0], [1], [0, 0, 1, 1], [], []>} : vector<16x16xbf16>, vector<16x256xbf16>, vector<16x256xf32> -> vector<16x256xf32>
    %149 = vector.broadcast %5 : vector<16x1xf32> to vector<16x256xf32>
    %150 = arith.addf %148, %149 : vector<16x256xf32>
    %c1_74 = arith.constant 1 : index
    %c0_75 = arith.constant 0 : index
    %c0_76 = arith.constant 0 : index
    %151 = vector.load %arg1[%c1_74, %c0_75, %c0_76] : memref<2x16x256xf32, #tpu.memory_space<vmem>>, vector<1x16x256xf32>
    %152 = vector.shape_cast %151 : vector<1x16x256xf32> to vector<16x256xf32>
    %153 = arith.addf %150, %152 : vector<16x256xf32>
    %cst_77 = arith.constant 0.000000e+00 : f32
    %154 = vector.broadcast %cst_77 : f32 to vector<16x256xf32>
    %155 = arith.maximumf %153, %154 : vector<16x256xf32>
    %c1_78 = arith.constant 1 : index
    %c0_79 = arith.constant 0 : index
    %c0_80 = arith.constant 0 : index
    %156 = vector.load %arg9[%c1_78, %c0_79, %c0_80] : memref<2x16x256xf32, #tpu.memory_space<vmem>>, vector<1x16x256xf32>
    %157 = vector.shape_cast %156 : vector<1x16x256xf32> to vector<16x256xf32>
    %158 = vector.shape_cast %155 : vector<16x256xf32> to vector<1x16x256xf32>
    tpu.vector_store %arg9[%c1_78, %c0_79, %c0_80], %158 {strides = array<i32>} : memref<2x16x256xf32, #tpu.memory_space<vmem>>, vector<1x16x256xf32>,
    return
  }
  func.func @transform_0(%arg0: i32) -> (i32, i32, i32) {
    %c0_i32 = arith.constant 0 : i32
    %c0_i32_0 = arith.constant 0 : i32
    %c0_i32_1 = arith.constant 0 : i32
    return %arg0, %c0_i32, %c0_i32_0 : i32, i32, i32
  }
  func.func @transform_1(%arg0: i32) -> (i32, i32) {
    %c0_i32 = arith.constant 0 : i32
    %c0_i32_0 = arith.constant 0 : i32
    %c0_i32_1 = arith.constant 0 : i32
    return %c0_i32, %c0_i32_0 : i32, i32
  }
  func.func @transform_2(%arg0: i32) -> (i32, i32) {
    %c0_i32 = arith.constant 0 : i32
    %c0_i32_0 = arith.constant 0 : i32
    %c0_i32_1 = arith.constant 0 : i32
    return %c0_i32, %c0_i32_0 : i32, i32
  }
  func.func @transform_3(%arg0: i32) -> (i32, i32) {
    %c0_i32 = arith.constant 0 : i32
    %c0_i32_0 = arith.constant 0 : i32
    %c0_i32_1 = arith.constant 0 : i32
    return %c0_i32, %c0_i32_0 : i32, i32
  }
  func.func @transform_4(%arg0: i32) -> (i32, i32) {
    %c0_i32 = arith.constant 0 : i32
    %c0_i32_0 = arith.constant 0 : i32
    %c0_i32_1 = arith.constant 0 : i32
    return %c0_i32, %c0_i32_0 : i32, i32
  }
  func.func @transform_5(%arg0: i32) -> (i32, i32) {
    %c0_i32 = arith.constant 0 : i32
    %c0_i32_0 = arith.constant 0 : i32
    %c0_i32_1 = arith.constant 0 : i32
    return %c0_i32, %c0_i32_0 : i32, i32
  }
  func.func @transform_6(%arg0: i32) -> (i32, i32) {
    %c0_i32 = arith.constant 0 : i32
    %c0_i32_0 = arith.constant 0 : i32
    %c0_i32_1 = arith.constant 0 : i32
    return %c0_i32, %c0_i32_0 : i32, i32
  }
  func.func @transform_7(%arg0: i32) -> (i32, i32) {
    %c0_i32 = arith.constant 0 : i32
    %c0_i32_0 = arith.constant 0 : i32
    %c0_i32_1 = arith.constant 0 : i32
    return %c0_i32, %c0_i32_0 : i32, i32
  }
  func.func @transform_8(%arg0: i32) -> (i32, i32, i32) {
    %c0_i32 = arith.constant 0 : i32
    %c0_i32_0 = arith.constant 0 : i32
    %c0_i32_1 = arith.constant 0 : i32
    return %arg0, %c0_i32, %c0_i32_0 : i32, i32, i32
  }
}

</mosaic_0001>

<llo_original>
// kernel: _lambda_.1
$region0: #{_lambda_.1}
  #allocation0 [shape = 'u32[]', space=smem, size = 0x4, offset = 0x4, fixed_abs, tag = 'smem constant byte address 0x4 - core index']
  #allocation1 [shape = 'u32[144,128]{1,0:T(1,128)}', space=vmem, size = 0x12000, scoped, tag = 'internal scratch']
  #allocation2 [shape = 'bf16[144,256]{1,0:T(8,128)(2,1)}', space=vmem, size = 0x12000, scoped, tag = 'scratch operand']
  %s0 = inlined_call_operand.vmem [shape: f32[2,16,256], index: 0, kind: input, shape index: {}]
  %s1 = inlined_call_operand.vmem [shape: bf16[16,16], index: 1, kind: input, shape index: {}]
  %s2 = inlined_call_operand.vmem [shape: f32[16,1], index: 2, kind: input, shape index: {}]
  %s3 = inlined_call_operand.vmem [shape: bf16[16,144], index: 3, kind: input, shape index: {}]
  %s4 = inlined_call_operand.vmem [shape: f32[16,1], index: 4, kind: input, shape index: {}]
  %s5 = inlined_call_operand.vmem [shape: bf16[16,16], index: 5, kind: input, shape index: {}]
  %s6 = inlined_call_operand.vmem [shape: f32[16,1], index: 6, kind: input, shape index: {}]
  %s7 = inlined_call_operand.vmem [shape: f32[9,256], index: 7, kind: input, shape index: {}]
  %s8 = inlined_call_operand.vmem [shape: f32[2,16,256], index: 8, kind: output, shape index: {}]
  %s9 = sld [smem:[#allocation0]]
  $region42: #{_lambda_.1} parent=0
    _
  %s11 = ssub.s32 1, %s9
  %s12 = scalar_select 0, %s11, %s9
  // Predicated region
  $region2: #{_lambda_.1} parent=0 // pred_check
    _
  $region3: #{_lambda_.1} parent=0 // pred_check_branch
    %14 = sbr.rel (0) target = $region5
  $region4: #{_lambda_.1} parent=0 // pred_region
    _
  $region5: #{_lambda_.1} parent=0 // pred_fallthru
    _
  // Predicated region
  $region6: #{_lambda_.1} parent=0 // pred_check
    _
  $region7: #{_lambda_.1} parent=0 // pred_check_branch
    %16 = sbr.rel (0) target = $region9
  $region8: #{_lambda_.1} parent=0 // pred_region
    _
  $region9: #{_lambda_.1} parent=0 // pred_fallthru
    _
  // Predicated region
  $region10: #{_lambda_.1} parent=0 // pred_check
    _
  $region11: #{_lambda_.1} parent=0 // pred_check_branch
    %18 = sbr.rel (0) target = $region13
  $region12: #{_lambda_.1} parent=0 // pred_region
    _
  $region13: #{_lambda_.1} parent=0 // pred_fallthru
    _
  // Predicated region
  $region14: #{_lambda_.1} parent=0 // pred_check
    _
  $region15: #{_lambda_.1} parent=0 // pred_check_branch
    %20 = sbr.rel (0) target = $region17
  $region16: #{_lambda_.1} parent=0 // pred_region
    _
  $region17: #{_lambda_.1} parent=0 // pred_fallthru
    _
  // Predicated region
  $region18: #{_lambda_.1} parent=0 // pred_check
    _
  $region19: #{_lambda_.1} parent=0 // pred_check_branch
    %22 = sbr.rel (0) target = $region21
  $region20: #{_lambda_.1} parent=0 // pred_region
    _
  $region21: #{_lambda_.1} parent=0 // pred_fallthru
    _
  // Predicated region
  $region22: #{_lambda_.1} parent=0 // pred_check
    _
  $region23: #{_lambda_.1} parent=0 // pred_check_branch
    %24 = sbr.rel (0) target = $region25
  $region24: #{_lambda_.1} parent=0 // pred_region
    _
  $region25: #{_lambda_.1} parent=0 // pred_fallthru
    _
  // Predicated region
  $region26: #{_lambda_.1} parent=0 // pred_check
    _
  $region27: #{_lambda_.1} parent=0 // pred_check_branch
    %26 = sbr.rel (0) target = $region29
  $region28: #{_lambda_.1} parent=0 // pred_region
    _
  $region29: #{_lambda_.1} parent=0 // pred_fallthru
    _
  // Predicated region
  $region30: #{_lambda_.1} parent=0 // pred_check
    _
  $region31: #{_lambda_.1} parent=0 // pred_check_branch
    %28 = sbr.rel (0) target = $region33
  $region32: #{_lambda_.1} parent=0 // pred_region
    _
  $region33: #{_lambda_.1} parent=0 // pred_fallthru
    _
  %v30 = vld [vmem:[%s1] sm:$0xf]
  %v31 = vld [vmem:[%s1 + $0x4] sm:$0xf]
  %v32 = vld [vmem:[%s3] sm:$0xff]
  %v33 = vld [vmem:[%s3 + $0x8] sm:$0xff]
  %v34 = vld [vmem:[%s5] sm:$0xf]
  %v35 = vld [vmem:[%s5 + $0x4] sm:$0xf]
  %v36 = vld [vmem:[%s2] sm:$0xff]
  %v37 = vld [vmem:[%s2 + $0x8] sm:$0xff]
  %v38 = vld [vmem:[%s4] sm:$0xff]
  %v39 = vld [vmem:[%s4 + $0x8] sm:$0xff]
  %v40 = vld [vmem:[%s6] sm:$0xff]
  %v41 = vld [vmem:[%s6 + $0x8] sm:$0xff]
  %v42 = vld [vmem:[%s7] sm:$0xff]
  %v43 = vld [vmem:[%s7 + $0x8] sm:$0xff]
  %v44 = vld [vmem:[%s7 + $0x10] sm:$0x1]
  %v45 = vld [vmem:[%s7 + $0x18] sm:$0x1]
  %v46 = vld [vmem:[%s0] sm:$0xff]
  %v47 = vld [vmem:[%s0 + $0x8] sm:$0xff]
  %v48 = vld [vmem:[%s0 + $0x10] sm:$0xff]
  %v49 = vld [vmem:[%s0 + $0x18] sm:$0xff]
  %v50 = vpack.c.bf16 %v48, %v46
  %v51 = vpack.c.bf16 %v49, %v47
  %53 = vset.pattern.permute.xlu0 0
  %54 = vperm.xlu0 %53, %v36
  %v55 = vpop.permute.xlu0 %54
  %58 = vset.pattern.permute.xlu0 0
  %59 = vperm.xlu0 %58, %v37
  %v60 = vpop.permute.xlu0 %59
  %v64 = vunpack.c.l.b16 %v30
  %v65 = vunpack.c.l.b16 %v31
  %v66 = vpack.c.b16 %v65, %v64
  %vm67 = vcmask 130048
  %v69 = vsel %vm67, %v66, 0
  %71 = vmatprep.subr.bf16.mxu0 0
  %72 = vmatpush1.bf16.msra.mxu0 0
  %73 = vmatprep.subr.bf16.mxu0 0
  %74 = vmatpush1.bf16.msra.mxu0 0
  %75 = vmatprep.subr.bf16.mxu0 0
  %76 = vmatpush1.bf16.msra.mxu0 0
  %77 = vmatprep.subr.bf16.mxu0 0
  %78 = vmatpush1.bf16.msra.mxu0 0
  %79 = vmatprep.subr.bf16.mxu0 0
  %80 = vmatpush1.bf16.msra.mxu0 0
  %81 = vmatprep.subr.bf16.mxu0 0
  %82 = vmatpush1.bf16.msra.mxu0 0
  %83 = vmatprep.subr.bf16.mxu0 0
  %84 = vmatpush1.bf16.msra.mxu0 0
  %85 = vmatprep.subr.bf16.mxu0 %v51
  %86 = vmatpush1.bf16.msra.mxu0 %v50
  %87 = vmatprep.subr.bf16.mxu0 0
  %88 = vmatpush2.bf16.msra.mxu0 0
  %89 = vmatprep.subr.bf16.mxu0 0
  %90 = vmatpush2.bf16.msra.mxu0 0
  %91 = vmatprep.subr.bf16.mxu0 0
  %92 = vmatpush2.bf16.msra.mxu0 0
  %93 = vmatprep.subr.bf16.mxu0 0
  %94 = vmatpush2.bf16.msra.mxu0 0
  %95 = vmatprep.subr.bf16.mxu0 0
  %96 = vmatpush2.bf16.msra.mxu0 0
  %97 = vmatprep.subr.bf16.mxu0 0
  %98 = vmatpush2.bf16.msra.mxu0 0
  %99 = vmatprep.subr.bf16.mxu0 0
  %100 = vmatpush2.bf16.msra.mxu0 0
  %101 = vmatprep.subr.bf16.mxu0 0
  %102 = vmatpush2.bf16.msra.mxu0 0
  %103 = vmatprep.mubr.bf16.mxu0 0
  %104 = vmatmul.mubr.bf16.gmra.mxu0 %v69
  %v105 = vpop.f32.mrf.mxu0
  %v106 = vadd.f32 %v55, %v105
  %v107 = vpop.f32.mrf.mxu0
  %v108 = vadd.f32 %v55, %v107
  %v109 = vpop.f32.mrf.mxu0
  %v110 = vadd.f32 %v60, %v109
  %v111 = vpop.f32.mrf.mxu0
  %v112 = vadd.f32 %v60, %v111
  %113 = vdwg.mxu0
  %v114 = vmax.f32 %v106, 0.0
  %v115 = vmax.f32 %v108, 0.0
  %v116 = vmax.f32 %v110, 0.0
  %v117 = vmax.f32 %v112, 0.0
  %118 = vrot.lane.b32.xlu0 %v114, 17
  %v119 = vpop.permute.xlu0 %118
  %120 = vrot.lane.b32.xlu0 %v116, 17
  %v121 = vpop.permute.xlu0 %120
  %122 = vrot.lane.b32.xlu0 %v115, 17
  %v123 = vpop.permute.xlu0 %122
  %124 = vrot.lane.b32.xlu0 %v117, 17
  %v125 = vpop.permute.xlu0 %124
  %v126 = vlaneseq
  %v127 = vand.u32 %v126, 127
  %vm128 = vcmp.lt.s32.totalorder %v127, 17
  %v129 = vsel %vm128, %v119, %v123
  %v130 = vsel %vm128, %v121, %v125
  %v131 = vsel %vm128, %v123, %v119
  %v132 = vsel %vm128, %v125, %v121
  %v133 = vlaneseq
  %v134 = vshrl.u32 %v133, 7
  %v135 = vsub.s32 0, %v134
  %v136 = vrot.slane %v42, %v135
  %v137 = vlaneseq
  %v138 = vshrl.u32 %v137, 7
  %v139 = vsub.s32 0, %v138
  %v140 = vrot.slane %v43, %v139
  %v141 = vmul.f32 %v131, %v136
  %v142 = vmul.f32 %v129, %v140
  %v143 = vmul.f32 %v132, %v136
  %v144 = vmul.f32 %v130, %v140
  %v145 = vpack.c.bf16 %v143, %v141
  %v146 = vpack.c.bf16 %v144, %v142
  %v149 = vunpack.c.l.b16 %v145
  %v150 = vunpack.c.l.b16 %v146
  %v151 = vunpack.c.h.b16 %v145
  %v152 = vunpack.c.h.b16 %v146
  %v153 = vpack.c.b16 %v150, %v149
  %v154 = vpack.c.b16 %v152, %v151
  %157 = vst [vmem:[#allocation2] sm:$0xff] %v153
  %158 = vst [vmem:[#allocation2 + $0x8] sm:$0xff] %v154
  %159 = vrot.lane.b32.xlu0 %v114, 16
  %v160 = vpop.permute.xlu0 %159
  %161 = vrot.lane.b32.xlu0 %v116, 16
  %v162 = vpop.permute.xlu0 %161
  %163 = vrot.lane.b32.xlu0 %v115, 16
  %v164 = vpop.permute.xlu0 %163
  %165 = vrot.lane.b32.xlu0 %v117, 16
  %v166 = vpop.permute.xlu0 %165
  %vm167 = vcmp.lt.s32.totalorder %v127, 16
  %v168 = vsel %vm167, %v160, %v164
  %v169 = vsel %vm167, %v162, %v166
  %v170 = vsel %vm167, %v164, %v160
  %v171 = vsel %vm167, %v166, %v162
  %v172 = vlaneseq
  %v173 = vshrl.u32 %v172, 7
  %v174 = vsub.s32 1, %v173
  %v175 = vrot.slane %v42, %v174
  %v176 = vlaneseq
  %v177 = vshrl.u32 %v176, 7
  %v178 = vsub.s32 1, %v177
  %v179 = vrot.slane %v43, %v178
  %v180 = vmul.f32 %v170, %v175
  %v181 = vmul.f32 %v168, %v179
  %v182 = vmul.f32 %v171, %v175
  %v183 = vmul.f32 %v169, %v179
  %v184 = vpack.c.bf16 %v182, %v180
  %v185 = vpack.c.bf16 %v183, %v181
  %v188 = vunpack.c.l.b16 %v184
  %v189 = vunpack.c.l.b16 %v185
  %v190 = vunpack.c.h.b16 %v184
  %v191 = vunpack.c.h.b16 %v185
  %v192 = vpack.c.b16 %v189, %v188
  %v193 = vpack.c.b16 %v191, %v190
  %196 = vst [vmem:[#allocation2 + $0x10] sm:$0xff] %v192
  %197 = vst [vmem:[#allocation2 + $0x18] sm:$0xff] %v193
  %198 = vrot.lane.b32.xlu0 %v114, 15
  %v199 = vpop.permute.xlu0 %198
  %200 = vrot.lane.b32.xlu0 %v116, 15
  %v201 = vpop.permute.xlu0 %200
  %202 = vrot.lane.b32.xlu0 %v115, 15
  %v203 = vpop.permute.xlu0 %202
  %204 = vrot.lane.b32.xlu0 %v117, 15
  %v205 = vpop.permute.xlu0 %204
  %vm206 = vcmp.lt.s32.totalorder %v127, 15
  %v207 = vsel %vm206, %v199, %v203
  %v208 = vsel %vm206, %v201, %v205
  %v209 = vsel %vm206, %v203, %v199
  %v210 = vsel %vm206, %v205, %v201
  %v211 = vlaneseq
  %v212 = vshrl.u32 %v211, 7
  %v213 = vsub.s32 2, %v212
  %v214 = vrot.slane %v42, %v213
  %v215 = vlaneseq
  %v216 = vshrl.u32 %v215, 7
  %v217 = vsub.s32 2, %v216
  %v218 = vrot.slane %v43, %v217
  %v219 = vmul.f32 %v209, %v214
  %v220 = vmul.f32 %v207, %v218
  %v221 = vmul.f32 %v210, %v214
  %v222 = vmul.f32 %v208, %v218
  %v223 = vpack.c.bf16 %v221, %v219
  %v224 = vpack.c.bf16 %v222, %v220
  %v227 = vunpack.c.l.b16 %v223
  %v228 = vunpack.c.l.b16 %v224
  %v229 = vunpack.c.h.b16 %v223
  %v230 = vunpack.c.h.b16 %v224
  %v231 = vpack.c.b16 %v228, %v227
  %v232 = vpack.c.b16 %v230, %v229
  %235 = vst [vmem:[#allocation2 + $0x20] sm:$0xff] %v231
  %236 = vst [vmem:[#allocation2 + $0x28] sm:$0xff] %v232
  %237 = vrot.lane.b32.xlu0 %v114, 1
  %v238 = vpop.permute.xlu0 %237
  %239 = vrot.lane.b32.xlu0 %v116, 1
  %v240 = vpop.permute.xlu0 %239
  %241 = vrot.lane.b32.xlu0 %v115, 1
  %v242 = vpop.permute.xlu0 %241
  %243 = vrot.lane.b32.xlu0 %v117, 1
  %v244 = vpop.permute.xlu0 %243
  %vm245 = vcmp.lt.s32.totalorder %v127, 1
  %v246 = vsel %vm245, %v238, %v242
  %v247 = vsel %vm245, %v240, %v244
  %v248 = vsel %vm245, %v242, %v238
  %v249 = vsel %vm245, %v244, %v240
  %v250 = vlaneseq
  %v251 = vshrl.u32 %v250, 7
  %v252 = vsub.s32 3, %v251
  %v253 = vrot.slane %v42, %v252
  %v254 = vlaneseq
  %v255 = vshrl.u32 %v254, 7
  %v256 = vsub.s32 3, %v255
  %v257 = vrot.slane %v43, %v256
  %v258 = vmul.f32 %v248, %v253
  %v259 = vmul.f32 %v246, %v257
  %v260 = vmul.f32 %v249, %v253
  %v261 = vmul.f32 %v247, %v257
  %v262 = vpack.c.bf16 %v260, %v258
  %v263 = vpack.c.bf16 %v261, %v259
  %v266 = vunpack.c.l.b16 %v262
  %v267 = vunpack.c.l.b16 %v263
  %v268 = vunpack.c.h.b16 %v262
  %v269 = vunpack.c.h.b16 %v263
  %v270 = vpack.c.b16 %v267, %v266
  %v271 = vpack.c.b16 %v269, %v268
  %274 = vst [vmem:[#allocation2 + $0x30] sm:$0xff] %v270
  %275 = vst [vmem:[#allocation2 + $0x38] sm:$0xff] %v271
  %v276 = vpack.c.bf16 %v116, %v114
  %v277 = vpack.c.bf16 %v117, %v115
  %v280 = vunpack.c.l.b16 %v276
  %v281 = vunpack.c.l.b16 %v277
  %v282 = vunpack.c.h.b16 %v276
  %v283 = vunpack.c.h.b16 %v277
  %v284 = vpack.c.b16 %v281, %v280
  %v285 = vpack.c.b16 %v283, %v282
  %288 = vst [vmem:[#allocation2 + $0x40] sm:$0xff] %v284
  %289 = vst [vmem:[#allocation2 + $0x48] sm:$0xff] %v285
  %290 = vrot.lane.b32.xlu0 %v114, 127
  %v291 = vpop.permute.xlu0 %290
  %292 = vrot.lane.b32.xlu0 %v116, 127
  %v293 = vpop.permute.xlu0 %292
  %294 = vrot.lane.b32.xlu0 %v115, 127
  %v295 = vpop.permute.xlu0 %294
  %296 = vrot.lane.b32.xlu0 %v117, 127
  %v297 = vpop.permute.xlu0 %296
  %vm298 = vcmp.lt.s32.totalorder %v127, 127
  %v299 = vsel %vm298, %v291, %v295
  %v300 = vsel %vm298, %v293, %v297
  %v301 = vsel %vm298, %v295, %v291
  %v302 = vsel %vm298, %v297, %v293
  %v303 = vlaneseq
  %v304 = vshrl.u32 %v303, 7
  %v305 = vsub.s32 5, %v304
  %v306 = vrot.slane %v42, %v305
  %v307 = vlaneseq
  %v308 = vshrl.u32 %v307, 7
  %v309 = vsub.s32 5, %v308
  %v310 = vrot.slane %v43, %v309
  %v311 = vmul.f32 %v299, %v306
  %v312 = vmul.f32 %v301, %v310
  %v313 = vmul.f32 %v300, %v306
  %v314 = vmul.f32 %v302, %v310
  %v315 = vpack.c.bf16 %v313, %v311
  %v316 = vpack.c.bf16 %v314, %v312
  %v319 = vunpack.c.l.b16 %v315
  %v320 = vunpack.c.l.b16 %v316
  %v321 = vunpack.c.h.b16 %v315
  %v322 = vunpack.c.h.b16 %v316
  %v323 = vpack.c.b16 %v320, %v319
  %v324 = vpack.c.b16 %v322, %v321
  %327 = vst [vmem:[#allocation2 + $0x50] sm:$0xff] %v323
  %328 = vst [vmem:[#allocation2 + $0x58] sm:$0xff] %v324
  %329 = vrot.lane.b32.xlu0 %v114, 113
  %v330 = vpop.permute.xlu0 %329
  %331 = vrot.lane.b32.xlu0 %v116, 113
  %v332 = vpop.permute.xlu0 %331
  %333 = vrot.lane.b32.xlu0 %v115, 113
  %v334 = vpop.permute.xlu0 %333
  %335 = vrot.lane.b32.xlu0 %v117, 113
  %v336 = vpop.permute.xlu0 %335
  %vm337 = vcmp.lt.s32.totalorder %v127, 113
  %v338 = vsel %vm337, %v330, %v334
  %v339 = vsel %vm337, %v332, %v336
  %v340 = vsel %vm337, %v334, %v330
  %v341 = vsel %vm337, %v336, %v332
  %v342 = vlaneseq
  %v343 = vshrl.u32 %v342, 7
  %v344 = vsub.s32 6, %v343
  %v345 = vrot.slane %v42, %v344
  %v346 = vlaneseq
  %v347 = vshrl.u32 %v346, 7
  %v348 = vsub.s32 6, %v347
  %v349 = vrot.slane %v43, %v348
  %v350 = vmul.f32 %v338, %v345
  %v351 = vmul.f32 %v340, %v349
  %v352 = vmul.f32 %v339, %v345
  %v353 = vmul.f32 %v341, %v349
  %v354 = vpack.c.bf16 %v352, %v350
  %v355 = vpack.c.bf16 %v353, %v351
  %v358 = vunpack.c.l.b16 %v354
  %v359 = vunpack.c.l.b16 %v355
  %v360 = vunpack.c.h.b16 %v354
  %v361 = vunpack.c.h.b16 %v355
  %v362 = vpack.c.b16 %v359, %v358
  %v363 = vpack.c.b16 %v361, %v360
  %366 = vst [vmem:[#allocation2 + $0x60] sm:$0xff] %v362
  %367 = vst [vmem:[#allocation2 + $0x68] sm:$0xff] %v363
  %368 = vrot.lane.b32.xlu0 %v114, 112
  %v369 = vpop.permute.xlu0 %368
  %370 = vrot.lane.b32.xlu0 %v116, 112
  %v371 = vpop.permute.xlu0 %370
  %372 = vrot.lane.b32.xlu0 %v115, 112
  %v373 = vpop.permute.xlu0 %372
  %374 = vrot.lane.b32.xlu0 %v117, 112
  %v375 = vpop.permute.xlu0 %374
  %vm376 = vcmp.lt.s32.totalorder %v127, 112
  %v377 = vsel %vm376, %v369, %v373
  %v378 = vsel %vm376, %v371, %v375
  %v379 = vsel %vm376, %v373, %v369
  %v380 = vsel %vm376, %v375, %v371
  %v381 = vlaneseq
  %v382 = vshrl.u32 %v381, 7
  %v383 = vsub.s32 7, %v382
  %v384 = vrot.slane %v42, %v383
  %v385 = vlaneseq
  %v386 = vshrl.u32 %v385, 7
  %v387 = vsub.s32 7, %v386
  %v388 = vrot.slane %v43, %v387
  %v389 = vmul.f32 %v377, %v384
  %v390 = vmul.f32 %v379, %v388
  %v391 = vmul.f32 %v378, %v384
  %v392 = vmul.f32 %v380, %v388
  %v393 = vpack.c.bf16 %v391, %v389
  %v394 = vpack.c.bf16 %v392, %v390
  %v397 = vunpack.c.l.b16 %v393
  %v398 = vunpack.c.l.b16 %v394
  %v399 = vunpack.c.h.b16 %v393
  %v400 = vunpack.c.h.b16 %v394
  %v401 = vpack.c.b16 %v398, %v397
  %v402 = vpack.c.b16 %v400, %v399
  %405 = vst [vmem:[#allocation2 + $0x70] sm:$0xff] %v401
  %406 = vst [vmem:[#allocation2 + $0x78] sm:$0xff] %v402
  %407 = vrot.lane.b32.xlu0 %v114, 111
  %v408 = vpop.permute.xlu0 %407
  %409 = vrot.lane.b32.xlu0 %v116, 111
  %v410 = vpop.permute.xlu0 %409
  %411 = vrot.lane.b32.xlu0 %v115, 111
  %v412 = vpop.permute.xlu0 %411
  %413 = vrot.lane.b32.xlu0 %v117, 111
  %v414 = vpop.permute.xlu0 %413
  %vm415 = vcmp.lt.s32.totalorder %v127, 111
  %v416 = vsel %vm415, %v408, %v412
  %v417 = vsel %vm415, %v410, %v414
  %v418 = vsel %vm415, %v412, %v408
  %v419 = vsel %vm415, %v414, %v410
  %v420 = vlaneseq
  %v421 = vshrl.u32 %v420, 7
  %v422 = vsub.s32 0, %v421
  %v423 = vrot.slane %v44, %v422
  %v424 = vlaneseq
  %v425 = vshrl.u32 %v424, 7
  %v426 = vsub.s32 0, %v425
  %v427 = vrot.slane %v45, %v426
  %v428 = vmul.f32 %v416, %v423
  %v429 = vmul.f32 %v418, %v427
  %v430 = vmul.f32 %v417, %v423
  %v431 = vmul.f32 %v419, %v427
  %v432 = vpack.c.bf16 %v430, %v428
  %v433 = vpack.c.bf16 %v431, %v429
  %v436 = vunpack.c.l.b16 %v432
  %v437 = vunpack.c.l.b16 %v433
  %v438 = vunpack.c.h.b16 %v432
  %v439 = vunpack.c.h.b16 %v433
  %v440 = vpack.c.b16 %v437, %v436
  %v441 = vpack.c.b16 %v439, %v438
  %444 = vst [vmem:[#allocation2 + $0x80] sm:$0xff] %v440
  %445 = vst [vmem:[#allocation2 + $0x88] sm:$0xff] %v441
  %v446 = vld [vmem:[#allocation2] sm:$0xff]
  %v447 = vld [vmem:[#allocation2 + $0x8] sm:$0xff]
  %v448 = vld [vmem:[#allocation2 + $0x10] sm:$0xff]
  %v449 = vld [vmem:[#allocation2 + $0x18] sm:$0xff]
  %v450 = vld [vmem:[#allocation2 + $0x20] sm:$0xff]
  %v451 = vld [vmem:[#allocation2 + $0x28] sm:$0xff]
  %v452 = vld [vmem:[#allocation2 + $0x30] sm:$0xff]
  %v453 = vld [vmem:[#allocation2 + $0x38] sm:$0xff]
  %v454 = vld [vmem:[#allocation2 + $0x40] sm:$0xff]
  %v455 = vld [vmem:[#allocation2 + $0x48] sm:$0xff]
  %v456 = vld [vmem:[#allocation2 + $0x50] sm:$0xff]
  %v457 = vld [vmem:[#allocation2 + $0x58] sm:$0xff]
  %v458 = vld [vmem:[#allocation2 + $0x60] sm:$0xff]
  %v459 = vld [vmem:[#allocation2 + $0x68] sm:$0xff]
  %v460 = vld [vmem:[#allocation2 + $0x70] sm:$0xff]
  %v461 = vld [vmem:[#allocation2 + $0x78] sm:$0xff]
  %v462 = vld [vmem:[#allocation2 + $0x80] sm:$0xff]
  %v463 = vld [vmem:[#allocation2 + $0x88] sm:$0xff]
  %465 = vset.pattern.permute.xlu0 0
  %466 = vperm.xlu0 %465, %v38
  %v467 = vpop.permute.xlu0 %466
  %470 = vset.pattern.permute.xlu0 0
  %471 = vperm.xlu0 %470, %v39
  %v472 = vpop.permute.xlu0 %471
  %v476 = vunpack.c.l.b16 %v32
  %v477 = vunpack.c.h.b16 %v32
  %v478 = vunpack.c.l.b16 %v33
  %v479 = vunpack.c.h.b16 %v33
  %v480 = vpack.c.b16 %v478, %v476
  %v481 = vpack.c.b16 %v479, %v477
  %v501 = vunpack.c.l.b16 %v446
  %v502 = vunpack.c.h.b16 %v446
  %v503 = vunpack.c.l.b16 %v447
  %v504 = vunpack.c.h.b16 %v447
  %v505 = vunpack.c.l.b16 %v448
  %v506 = vunpack.c.h.b16 %v448
  %v507 = vunpack.c.l.b16 %v449
  %v508 = vunpack.c.h.b16 %v449
  %v509 = vunpack.c.l.b16 %v450
  %v510 = vunpack.c.h.b16 %v450
  %v511 = vunpack.c.l.b16 %v451
  %v512 = vunpack.c.h.b16 %v451
  %v513 = vunpack.c.l.b16 %v452
  %v514 = vunpack.c.h.b16 %v452
  %v515 = vunpack.c.l.b16 %v453
  %v516 = vunpack.c.h.b16 %v453
  %v517 = vunpack.c.l.b16 %v454
  %v518 = vunpack.c.h.b16 %v454
  %v519 = vunpack.c.l.b16 %v455
  %v520 = vunpack.c.h.b16 %v455
  %v521 = vunpack.c.l.b16 %v456
  %v522 = vunpack.c.h.b16 %v456
  %v523 = vunpack.c.l.b16 %v457
  %v524 = vunpack.c.h.b16 %v457
  %v525 = vunpack.c.l.b16 %v458
  %v526 = vunpack.c.h.b16 %v458
  %v527 = vunpack.c.l.b16 %v459
  %v528 = vunpack.c.h.b16 %v459
  %v529 = vunpack.c.l.b16 %v460
  %v530 = vunpack.c.h.b16 %v460
  %v531 = vunpack.c.l.b16 %v461
  %v532 = vunpack.c.h.b16 %v461
  %v533 = vunpack.c.l.b16 %v462
  %v534 = vunpack.c.h.b16 %v462
  %v535 = vunpack.c.l.b16 %v463
  %v536 = vunpack.c.h.b16 %v463
  %v537 = vpack.c.b16 %v503, %v501
  %v538 = vpack.c.b16 %v504, %v502
  %v539 = vpack.c.b16 %v507, %v505
  %v540 = vpack.c.b16 %v508, %v506
  %v541 = vpack.c.b16 %v511, %v509
  %v542 = vpack.c.b16 %v512, %v510
  %v543 = vpack.c.b16 %v515, %v513
  %v544 = vpack.c.b16 %v516, %v514
  %v545 = vpack.c.b16 %v519, %v517
  %v546 = vpack.c.b16 %v520, %v518
  %v547 = vpack.c.b16 %v523, %v521
  %v548 = vpack.c.b16 %v524, %v522
  %v549 = vpack.c.b16 %v527, %v525
  %v550 = vpack.c.b16 %v528, %v526
  %v551 = vpack.c.b16 %v531, %v529
  %v552 = vpack.c.b16 %v532, %v530
  %v553 = vpack.c.b16 %v535, %v533
  %v554 = vpack.c.b16 %v536, %v534
  %v574 = vsel %vm67, %v481, 0
  %576 = vmatprep.subr.bf16.mxu0 %v552
  %577 = vmatpush1.bf16.msra.mxu0 %v551
  %578 = vmatprep.subr.bf16.mxu0 %v550
  %579 = vmatpush1.bf16.msra.mxu0 %v549
  %580 = vmatprep.subr.bf16.mxu0 %v548
  %581 = vmatpush1.bf16.msra.mxu0 %v547
  %582 = vmatprep.subr.bf16.mxu0 %v546
  %583 = vmatpush1.bf16.msra.mxu0 %v545
  %584 = vmatprep.subr.bf16.mxu0 %v544
  %585 = vmatpush1.bf16.msra.mxu0 %v543
  %586 = vmatprep.subr.bf16.mxu0 %v542
  %587 = vmatpush1.bf16.msra.mxu0 %v541
  %588 = vmatprep.subr.bf16.mxu0 %v540
  %589 = vmatpush1.bf16.msra.mxu0 %v539
  %590 = vmatprep.subr.bf16.mxu0 %v538
  %591 = vmatpush1.bf16.msra.mxu0 %v537
  %592 = vmatprep.subr.bf16.mxu0 0
  %593 = vmatpush2.bf16.msra.mxu0 0
  %594 = vmatprep.subr.bf16.mxu0 0
  %595 = vmatpush2.bf16.msra.mxu0 0
  %596 = vmatprep.subr.bf16.mxu0 0
  %597 = vmatpush2.bf16.msra.mxu0 0
  %598 = vmatprep.subr.bf16.mxu0 0
  %599 = vmatpush2.bf16.msra.mxu0 0
  %600 = vmatprep.subr.bf16.mxu0 0
  %601 = vmatpush2.bf16.msra.mxu0 0
  %602 = vmatprep.subr.bf16.mxu0 0
  %603 = vmatpush2.bf16.msra.mxu0 0
  %604 = vmatprep.subr.bf16.mxu0 0
  %605 = vmatpush2.bf16.msra.mxu0 0
  %606 = vmatprep.subr.bf16.mxu0 %v554
  %607 = vmatpush2.bf16.msra.mxu0 %v553
  %608 = vmatprep.mubr.bf16.mxu0 %v574
  %609 = vmatmul.mubr.bf16.gmra.mxu0 %v480
  %v610 = vpop.f32.mrf.mxu0
  %v611 = vadd.f32 %v467, %v610
  %v612 = vpop.f32.mrf.mxu0
  %v613 = vadd.f32 %v467, %v612
  %v614 = vpop.f32.mrf.mxu0
  %v615 = vadd.f32 %v472, %v614
  %v616 = vpop.f32.mrf.mxu0
  %v617 = vadd.f32 %v472, %v616
  %618 = vdwg.mxu0
  %v619 = vmax.f32 %v611, 0.0
  %v620 = vmax.f32 %v613, 0.0
  %v621 = vmax.f32 %v615, 0.0
  %v622 = vmax.f32 %v617, 0.0
  %v623 = vpack.c.bf16 %v621, %v619
  %v624 = vpack.c.bf16 %v622, %v620
  %626 = vset.pattern.permute.xlu0 0
  %627 = vperm.xlu0 %626, %v40
  %v628 = vpop.permute.xlu0 %627
  %631 = vset.pattern.permute.xlu0 0
  %632 = vperm.xlu0 %631, %v41
  %v633 = vpop.permute.xlu0 %632
  %v637 = vunpack.c.l.b16 %v34
  %v638 = vunpack.c.l.b16 %v35
  %v639 = vpack.c.b16 %v638, %v637
  %v641 = vsel %vm67, %v639, 0
  %643 = vmatprep.subr.bf16.mxu0 0
  %644 = vmatpush1.bf16.msra.mxu0 0
  %645 = vmatprep.subr.bf16.mxu0 0
  %646 = vmatpush1.bf16.msra.mxu0 0
  %647 = vmatprep.subr.bf16.mxu0 0
  %648 = vmatpush1.bf16.msra.mxu0 0
  %649 = vmatprep.subr.bf16.mxu0 0
  %650 = vmatpush1.bf16.msra.mxu0 0
  %651 = vmatprep.subr.bf16.mxu0 0
  %652 = vmatpush1.bf16.msra.mxu0 0
  %653 = vmatprep.subr.bf16.mxu0 0
  %654 = vmatpush1.bf16.msra.mxu0 0
  %655 = vmatprep.subr.bf16.mxu0 0
  %656 = vmatpush1.bf16.msra.mxu0 0
  %657 = vmatprep.subr.bf16.mxu0 %v624
  %658 = vmatpush1.bf16.msra.mxu0 %v623
  %659 = vmatprep.subr.bf16.mxu0 0
  %660 = vmatpush2.bf16.msra.mxu0 0
  %661 = vmatprep.subr.bf16.mxu0 0
  %662 = vmatpush2.bf16.msra.mxu0 0
  %663 = vmatprep.subr.bf16.mxu0 0
  %664 = vmatpush2.bf16.msra.mxu0 0
  %665 = vmatprep.subr.bf16.mxu0 0
  %666 = vmatpush2.bf16.msra.mxu0 0
  %667 = vmatprep.subr.bf16.mxu0 0
  %668 = vmatpush2.bf16.msra.mxu0 0
  %669 = vmatprep.subr.bf16.mxu0 0
  %670 = vmatpush2.bf16.msra.mxu0 0
  %671 = vmatprep.subr.bf16.mxu0 0
  %672 = vmatpush2.bf16.msra.mxu0 0
  %673 = vmatprep.subr.bf16.mxu0 0
  %674 = vmatpush2.bf16.msra.mxu0 0
  %675 = vmatprep.mubr.bf16.mxu0 0
  %676 = vmatmul.mubr.bf16.gmra.mxu0 %v641
  %v677 = vpop.f32.mrf.mxu0
  %v678 = vadd.f32 %v628, %v677
  %v679 = vpop.f32.mrf.mxu0
  %v680 = vadd.f32 %v628, %v679
  %v681 = vpop.f32.mrf.mxu0
  %v682 = vadd.f32 %v633, %v681
  %v683 = vpop.f32.mrf.mxu0
  %v684 = vadd.f32 %v633, %v683
  %685 = vdwg.mxu0
  %v686 = vld [vmem:[%s0] sm:$0xff]
  %v687 = vld [vmem:[%s0 + $0x8] sm:$0xff]
  %v688 = vld [vmem:[%s0 + $0x10] sm:$0xff]
  %v689 = vld [vmem:[%s0 + $0x18] sm:$0xff]
  %v690 = vadd.f32 %v678, %v686
  %v691 = vadd.f32 %v680, %v687
  %v692 = vadd.f32 %v682, %v688
  %v693 = vadd.f32 %v684, %v689
  %v694 = vmax.f32 %v690, 0.0
  %v695 = vmax.f32 %v691, 0.0
  %v696 = vmax.f32 %v692, 0.0
  %v697 = vmax.f32 %v693, 0.0
  %698 = vst [vmem:[%s8] sm:$0xff] %v694
  %699 = vst [vmem:[%s8 + $0x8] sm:$0xff] %v695
  %700 = vst [vmem:[%s8 + $0x10] sm:$0xff] %v696
  %701 = vst [vmem:[%s8 + $0x18] sm:$0xff] %v697
  %s702 = scalar_lea.vmem %s0, 32
  %v703 = vld [vmem:[%s702] sm:$0xff]
  %v704 = vld [vmem:[%s702 + $0x8] sm:$0xff]
  %v705 = vld [vmem:[%s702 + $0x10] sm:$0xff]
  %v706 = vld [vmem:[%s702 + $0x18] sm:$0xff]
  %v707 = vpack.c.bf16 %v705, %v703
  %v708 = vpack.c.bf16 %v706, %v704
  %709 = vmatprep.subr.bf16.mxu0 0
  %710 = vmatpush1.bf16.msra.mxu0 0
  %711 = vmatprep.subr.bf16.mxu0 0
  %712 = vmatpush1.bf16.msra.mxu0 0
  %713 = vmatprep.subr.bf16.mxu0 0
  %714 = vmatpush1.bf16.msra.mxu0 0
  %715 = vmatprep.subr.bf16.mxu0 0
  %716 = vmatpush1.bf16.msra.mxu0 0
  %717 = vmatprep.subr.bf16.mxu0 0
  %718 = vmatpush1.bf16.msra.mxu0 0
  %719 = vmatprep.subr.bf16.mxu0 0
  %720 = vmatpush1.bf16.msra.mxu0 0
  %721 = vmatprep.subr.bf16.mxu0 0
  %722 = vmatpush1.bf16.msra.mxu0 0
  %723 = vmatprep.subr.bf16.mxu0 %v708
  %724 = vmatpush1.bf16.msra.mxu0 %v707
  %725 = vmatprep.subr.bf16.mxu0 0
  %726 = vmatpush2.bf16.msra.mxu0 0
  %727 = vmatprep.subr.bf16.mxu0 0
  %728 = vmatpush2.bf16.msra.mxu0 0
  %729 = vmatprep.subr.bf16.mxu0 0
  %730 = vmatpush2.bf16.msra.mxu0 0
  %731 = vmatprep.subr.bf16.mxu0 0
  %732 = vmatpush2.bf16.msra.mxu0 0
  %733 = vmatprep.subr.bf16.mxu0 0
  %734 = vmatpush2.bf16.msra.mxu0 0
  %735 = vmatprep.subr.bf16.mxu0 0
  %736 = vmatpush2.bf16.msra.mxu0 0
  %737 = vmatprep.subr.bf16.mxu0 0
  %738 = vmatpush2.bf16.msra.mxu0 0
  %739 = vmatprep.subr.bf16.mxu0 0
  %740 = vmatpush2.bf16.msra.mxu0 0
  %741 = vmatprep.mubr.bf16.mxu0 0
  %742 = vmatmul.mubr.bf16.gmra.mxu0 %v69
  %v743 = vpop.f32.mrf.mxu0
  %v744 = vadd.f32 %v55, %v743
  %v745 = vpop.f32.mrf.mxu0
  %v746 = vadd.f32 %v55, %v745
  %v747 = vpop.f32.mrf.mxu0
  %v748 = vadd.f32 %v60, %v747
  %v749 = vpop.f32.mrf.mxu0
  %v750 = vadd.f32 %v60, %v749
  %751 = vdwg.mxu0
  %v752 = vmax.f32 %v744, 0.0
  %v753 = vmax.f32 %v746, 0.0
  %v754 = vmax.f32 %v748, 0.0
  %v755 = vmax.f32 %v750, 0.0
  %756 = vrot.lane.b32.xlu0 %v752, 17
  %v757 = vpop.permute.xlu0 %756
  %758 = vrot.lane.b32.xlu0 %v754, 17
  %v759 = vpop.permute.xlu0 %758
  %760 = vrot.lane.b32.xlu0 %v753, 17
  %v761 = vpop.permute.xlu0 %760
  %762 = vrot.lane.b32.xlu0 %v755, 17
  %v763 = vpop.permute.xlu0 %762
  %v764 = vsel %vm128, %v757, %v761
  %v765 = vsel %vm128, %v759, %v763
  %v766 = vsel %vm128, %v761, %v757
  %v767 = vsel %vm128, %v763, %v759
  %v768 = vmul.f32 %v766, %v136
  %v769 = vmul.f32 %v764, %v140
  %v770 = vmul.f32 %v767, %v136
  %v771 = vmul.f32 %v765, %v140
  %v772 = vpack.c.bf16 %v770, %v768
  %v773 = vpack.c.bf16 %v771, %v769
  %v776 = vunpack.c.l.b16 %v772
  %v777 = vunpack.c.l.b16 %v773
  %v778 = vunpack.c.h.b16 %v772
  %v779 = vunpack.c.h.b16 %v773
  %v780 = vpack.c.b16 %v777, %v776
  %v781 = vpack.c.b16 %v779, %v778
  %784 = vst [vmem:[#allocation2] sm:$0xff] %v780
  %785 = vst [vmem:[#allocation2 + $0x8] sm:$0xff] %v781
  %786 = vrot.lane.b32.xlu0 %v752, 16
  %v787 = vpop.permute.xlu0 %786
  %788 = vrot.lane.b32.xlu0 %v754, 16
  %v789 = vpop.permute.xlu0 %788
  %790 = vrot.lane.b32.xlu0 %v753, 16
  %v791 = vpop.permute.xlu0 %790
  %792 = vrot.lane.b32.xlu0 %v755, 16
  %v793 = vpop.permute.xlu0 %792
  %v794 = vsel %vm167, %v787, %v791
  %v795 = vsel %vm167, %v789, %v793
  %v796 = vsel %vm167, %v791, %v787
  %v797 = vsel %vm167, %v793, %v789
  %v798 = vmul.f32 %v796, %v175
  %v799 = vmul.f32 %v794, %v179
  %v800 = vmul.f32 %v797, %v175
  %v801 = vmul.f32 %v795, %v179
  %v802 = vpack.c.bf16 %v800, %v798
  %v803 = vpack.c.bf16 %v801, %v799
  %v806 = vunpack.c.l.b16 %v802
  %v807 = vunpack.c.l.b16 %v803
  %v808 = vunpack.c.h.b16 %v802
  %v809 = vunpack.c.h.b16 %v803
  %v810 = vpack.c.b16 %v807, %v806
  %v811 = vpack.c.b16 %v809, %v808
  %814 = vst [vmem:[#allocation2 + $0x10] sm:$0xff] %v810
  %815 = vst [vmem:[#allocation2 + $0x18] sm:$0xff] %v811
  %816 = vrot.lane.b32.xlu0 %v752, 15
  %v817 = vpop.permute.xlu0 %816
  %818 = vrot.lane.b32.xlu0 %v754, 15
  %v819 = vpop.permute.xlu0 %818
  %820 = vrot.lane.b32.xlu0 %v753, 15
  %v821 = vpop.permute.xlu0 %820
  %822 = vrot.lane.b32.xlu0 %v755, 15
  %v823 = vpop.permute.xlu0 %822
  %v824 = vsel %vm206, %v817, %v821
  %v825 = vsel %vm206, %v819, %v823
  %v826 = vsel %vm206, %v821, %v817
  %v827 = vsel %vm206, %v823, %v819
  %v828 = vmul.f32 %v826, %v214
  %v829 = vmul.f32 %v824, %v218
  %v830 = vmul.f32 %v827, %v214
  %v831 = vmul.f32 %v825, %v218
  %v832 = vpack.c.bf16 %v830, %v828
  %v833 = vpack.c.bf16 %v831, %v829
  %v836 = vunpack.c.l.b16 %v832
  %v837 = vunpack.c.l.b16 %v833
  %v838 = vunpack.c.h.b16 %v832
  %v839 = vunpack.c.h.b16 %v833
  %v840 = vpack.c.b16 %v837, %v836
  %v841 = vpack.c.b16 %v839, %v838
  %844 = vst [vmem:[#allocation2 + $0x20] sm:$0xff] %v840
  %845 = vst [vmem:[#allocation2 + $0x28] sm:$0xff] %v841
  %846 = vrot.lane.b32.xlu0 %v752, 1
  %v847 = vpop.permute.xlu0 %846
  %848 = vrot.lane.b32.xlu0 %v754, 1
  %v849 = vpop.permute.xlu0 %848
  %850 = vrot.lane.b32.xlu0 %v753, 1
  %v851 = vpop.permute.xlu0 %850
  %852 = vrot.lane.b32.xlu0 %v755, 1
  %v853 = vpop.permute.xlu0 %852
  %v854 = vsel %vm245, %v847, %v851
  %v855 = vsel %vm245, %v849, %v853
  %v856 = vsel %vm245, %v851, %v847
  %v857 = vsel %vm245, %v853, %v849
  %v858 = vmul.f32 %v856, %v253
  %v859 = vmul.f32 %v854, %v257
  %v860 = vmul.f32 %v857, %v253
  %v861 = vmul.f32 %v855, %v257
  %v862 = vpack.c.bf16 %v860, %v858
  %v863 = vpack.c.bf16 %v861, %v859
  %v866 = vunpack.c.l.b16 %v862
  %v867 = vunpack.c.l.b16 %v863
  %v868 = vunpack.c.h.b16 %v862
  %v869 = vunpack.c.h.b16 %v863
  %v870 = vpack.c.b16 %v867, %v866
  %v871 = vpack.c.b16 %v869, %v868
  %874 = vst [vmem:[#allocation2 + $0x30] sm:$0xff] %v870
  %875 = vst [vmem:[#allocation2 + $0x38] sm:$0xff] %v871
  %v876 = vpack.c.bf16 %v754, %v752
  %v877 = vpack.c.bf16 %v755, %v753
  %v880 = vunpack.c.l.b16 %v876
  %v881 = vunpack.c.l.b16 %v877
  %v882 = vunpack.c.h.b16 %v876
  %v883 = vunpack.c.h.b16 %v877
  %v884 = vpack.c.b16 %v881, %v880
  %v885 = vpack.c.b16 %v883, %v882
  %888 = vst [vmem:[#allocation2 + $0x40] sm:$0xff] %v884
  %889 = vst [vmem:[#allocation2 + $0x48] sm:$0xff] %v885
  %890 = vrot.lane.b32.xlu0 %v752, 127
  %v891 = vpop.permute.xlu0 %890
  %892 = vrot.lane.b32.xlu0 %v754, 127
  %v893 = vpop.permute.xlu0 %892
  %894 = vrot.lane.b32.xlu0 %v753, 127
  %v895 = vpop.permute.xlu0 %894
  %896 = vrot.lane.b32.xlu0 %v755, 127
  %v897 = vpop.permute.xlu0 %896
  %v898 = vsel %vm298, %v891, %v895
  %v899 = vsel %vm298, %v893, %v897
  %v900 = vsel %vm298, %v895, %v891
  %v901 = vsel %vm298, %v897, %v893
  %v902 = vmul.f32 %v898, %v306
  %v903 = vmul.f32 %v900, %v310
  %v904 = vmul.f32 %v899, %v306
  %v905 = vmul.f32 %v901, %v310
  %v906 = vpack.c.bf16 %v904, %v902
  %v907 = vpack.c.bf16 %v905, %v903
  %v910 = vunpack.c.l.b16 %v906
  %v911 = vunpack.c.l.b16 %v907
  %v912 = vunpack.c.h.b16 %v906
  %v913 = vunpack.c.h.b16 %v907
  %v914 = vpack.c.b16 %v911, %v910
  %v915 = vpack.c.b16 %v913, %v912
  %918 = vst [vmem:[#allocation2 + $0x50] sm:$0xff] %v914
  %919 = vst [vmem:[#allocation2 + $0x58] sm:$0xff] %v915
  %920 = vrot.lane.b32.xlu0 %v752, 113
  %v921 = vpop.permute.xlu0 %920
  %922 = vrot.lane.b32.xlu0 %v754, 113
  %v923 = vpop.permute.xlu0 %922
  %924 = vrot.lane.b32.xlu0 %v753, 113
  %v925 = vpop.permute.xlu0 %924
  %926 = vrot.lane.b32.xlu0 %v755, 113
  %v927 = vpop.permute.xlu0 %926
  %v928 = vsel %vm337, %v921, %v925
  %v929 = vsel %vm337, %v923, %v927
  %v930 = vsel %vm337, %v925, %v921
  %v931 = vsel %vm337, %v927, %v923
  %v932 = vmul.f32 %v928, %v345
  %v933 = vmul.f32 %v930, %v349
  %v934 = vmul.f32 %v929, %v345
  %v935 = vmul.f32 %v931, %v349
  %v936 = vpack.c.bf16 %v934, %v932
  %v937 = vpack.c.bf16 %v935, %v933
  %v940 = vunpack.c.l.b16 %v936
  %v941 = vunpack.c.l.b16 %v937
  %v942 = vunpack.c.h.b16 %v936
  %v943 = vunpack.c.h.b16 %v937
  %v944 = vpack.c.b16 %v941, %v940
  %v945 = vpack.c.b16 %v943, %v942
  %948 = vst [vmem:[#allocation2 + $0x60] sm:$0xff] %v944
  %949 = vst [vmem:[#allocation2 + $0x68] sm:$0xff] %v945
  %950 = vrot.lane.b32.xlu0 %v752, 112
  %v951 = vpop.permute.xlu0 %950
  %952 = vrot.lane.b32.xlu0 %v754, 112
  %v953 = vpop.permute.xlu0 %952
  %954 = vrot.lane.b32.xlu0 %v753, 112
  %v955 = vpop.permute.xlu0 %954
  %956 = vrot.lane.b32.xlu0 %v755, 112
  %v957 = vpop.permute.xlu0 %956
  %v958 = vsel %vm376, %v951, %v955
  %v959 = vsel %vm376, %v953, %v957
  %v960 = vsel %vm376, %v955, %v951
  %v961 = vsel %vm376, %v957, %v953
  %v962 = vmul.f32 %v958, %v384
  %v963 = vmul.f32 %v960, %v388
  %v964 = vmul.f32 %v959, %v384
  %v965 = vmul.f32 %v961, %v388
  %v966 = vpack.c.bf16 %v964, %v962
  %v967 = vpack.c.bf16 %v965, %v963
  %v970 = vunpack.c.l.b16 %v966
  %v971 = vunpack.c.l.b16 %v967
  %v972 = vunpack.c.h.b16 %v966
  %v973 = vunpack.c.h.b16 %v967
  %v974 = vpack.c.b16 %v971, %v970
  %v975 = vpack.c.b16 %v973, %v972
  %978 = vst [vmem:[#allocation2 + $0x70] sm:$0xff] %v974
  %979 = vst [vmem:[#allocation2 + $0x78] sm:$0xff] %v975
  %980 = vrot.lane.b32.xlu0 %v752, 111
  %v981 = vpop.permute.xlu0 %980
  %982 = vrot.lane.b32.xlu0 %v754, 111
  %v983 = vpop.permute.xlu0 %982
  %984 = vrot.lane.b32.xlu0 %v753, 111
  %v985 = vpop.permute.xlu0 %984
  %986 = vrot.lane.b32.xlu0 %v755, 111
  %v987 = vpop.permute.xlu0 %986
  %v988 = vsel %vm415, %v981, %v985
  %v989 = vsel %vm415, %v983, %v987
  %v990 = vsel %vm415, %v985, %v981
  %v991 = vsel %vm415, %v987, %v983
  %v992 = vmul.f32 %v988, %v423
  %v993 = vmul.f32 %v990, %v427
  %v994 = vmul.f32 %v989, %v423
  %v995 = vmul.f32 %v991, %v427
  %v996 = vpack.c.bf16 %v994, %v992
  %v997 = vpack.c.bf16 %v995, %v993
  %v1000 = vunpack.c.l.b16 %v996
  %v1001 = vunpack.c.l.b16 %v997
  %v1002 = vunpack.c.h.b16 %v996
  %v1003 = vunpack.c.h.b16 %v997
  %v1004 = vpack.c.b16 %v1001, %v1000
  %v1005 = vpack.c.b16 %v1003, %v1002
  %1008 = vst [vmem:[#allocation2 + $0x80] sm:$0xff] %v1004
  %1009 = vst [vmem:[#allocation2 + $0x88] sm:$0xff] %v1005
  %v1010 = vld [vmem:[#allocation2] sm:$0xff]
  %v1011 = vld [vmem:[#allocation2 + $0x8] sm:$0xff]
  %v1012 = vld [vmem:[#allocation2 + $0x10] sm:$0xff]
  %v1013 = vld [vmem:[#allocation2 + $0x18] sm:$0xff]
  %v1014 = vld [vmem:[#allocation2 + $0x20] sm:$0xff]
  %v1015 = vld [vmem:[#allocation2 + $0x28] sm:$0xff]
  %v1016 = vld [vmem:[#allocation2 + $0x30] sm:$0xff]
  %v1017 = vld [vmem:[#allocation2 + $0x38] sm:$0xff]
  %v1018 = vld [vmem:[#allocation2 + $0x40] sm:$0xff]
  %v1019 = vld [vmem:[#allocation2 + $0x48] sm:$0xff]
  %v1020 = vld [vmem:[#allocation2 + $0x50] sm:$0xff]
  %v1021 = vld [vmem:[#allocation2 + $0x58] sm:$0xff]
  %v1022 = vld [vmem:[#allocation2 + $0x60] sm:$0xff]
  %v1023 = vld [vmem:[#allocation2 + $0x68] sm:$0xff]
  %v1024 = vld [vmem:[#allocation2 + $0x70] sm:$0xff]
  %v1025 = vld [vmem:[#allocation2 + $0x78] sm:$0xff]
  %v1026 = vld [vmem:[#allocation2 + $0x80] sm:$0xff]
  %v1027 = vld [vmem:[#allocation2 + $0x88] sm:$0xff]
  %v1046 = vunpack.c.l.b16 %v1010
  %v1047 = vunpack.c.h.b16 %v1010
  %v1048 = vunpack.c.l.b16 %v1011
  %v1049 = vunpack.c.h.b16 %v1011
  %v1050 = vunpack.c.l.b16 %v1012
  %v1051 = vunpack.c.h.b16 %v1012
  %v1052 = vunpack.c.l.b16 %v1013
  %v1053 = vunpack.c.h.b16 %v1013
  %v1054 = vunpack.c.l.b16 %v1014
  %v1055 = vunpack.c.h.b16 %v1014
  %v1056 = vunpack.c.l.b16 %v1015
  %v1057 = vunpack.c.h.b16 %v1015
  %v1058 = vunpack.c.l.b16 %v1016
  %v1059 = vunpack.c.h.b16 %v1016
  %v1060 = vunpack.c.l.b16 %v1017
  %v1061 = vunpack.c.h.b16 %v1017
  %v1062 = vunpack.c.l.b16 %v1018
  %v1063 = vunpack.c.h.b16 %v1018
  %v1064 = vunpack.c.l.b16 %v1019
  %v1065 = vunpack.c.h.b16 %v1019
  %v1066 = vunpack.c.l.b16 %v1020
  %v1067 = vunpack.c.h.b16 %v1020
  %v1068 = vunpack.c.l.b16 %v1021
  %v1069 = vunpack.c.h.b16 %v1021
  %v1070 = vunpack.c.l.b16 %v1022
  %v1071 = vunpack.c.h.b16 %v1022
  %v1072 = vunpack.c.l.b16 %v1023
  %v1073 = vunpack.c.h.b16 %v1023
  %v1074 = vunpack.c.l.b16 %v1024
  %v1075 = vunpack.c.h.b16 %v1024
  %v1076 = vunpack.c.l.b16 %v1025
  %v1077 = vunpack.c.h.b16 %v1025
  %v1078 = vunpack.c.l.b16 %v1026
  %v1079 = vunpack.c.h.b16 %v1026
  %v1080 = vunpack.c.l.b16 %v1027
  %v1081 = vunpack.c.h.b16 %v1027
  %v1082 = vpack.c.b16 %v1048, %v1046
  %v1083 = vpack.c.b16 %v1049, %v1047
  %v1084 = vpack.c.b16 %v1052, %v1050
  %v1085 = vpack.c.b16 %v1053, %v1051
  %v1086 = vpack.c.b16 %v1056, %v1054
  %v1087 = vpack.c.b16 %v1057, %v1055
  %v1088 = vpack.c.b16 %v1060, %v1058
  %v1089 = vpack.c.b16 %v1061, %v1059
  %v1090 = vpack.c.b16 %v1064, %v1062
  %v1091 = vpack.c.b16 %v1065, %v1063
  %v1092 = vpack.c.b16 %v1068, %v1066
  %v1093 = vpack.c.b16 %v1069, %v1067
  %v1094 = vpack.c.b16 %v1072, %v1070
  %v1095 = vpack.c.b16 %v1073, %v1071
  %v1096 = vpack.c.b16 %v1076, %v1074
  %v1097 = vpack.c.b16 %v1077, %v1075
  %v1098 = vpack.c.b16 %v1080, %v1078
  %v1099 = vpack.c.b16 %v1081, %v1079
  %1118 = vmatprep.subr.bf16.mxu0 %v1097
  %1119 = vmatpush1.bf16.msra.mxu0 %v1096
  %1120 = vmatprep.subr.bf16.mxu0 %v1095
  %1121 = vmatpush1.bf16.msra.mxu0 %v1094
  %1122 = vmatprep.subr.bf16.mxu0 %v1093
  %1123 = vmatpush1.bf16.msra.mxu0 %v1092
  %1124 = vmatprep.subr.bf16.mxu0 %v1091
  %1125 = vmatpush1.bf16.msra.mxu0 %v1090
  %1126 = vmatprep.subr.bf16.mxu0 %v1089
  %1127 = vmatpush1.bf16.msra.mxu0 %v1088
  %1128 = vmatprep.subr.bf16.mxu0 %v1087
  %1129 = vmatpush1.bf16.msra.mxu0 %v1086
  %1130 = vmatprep.subr.bf16.mxu0 %v1085
  %1131 = vmatpush1.bf16.msra.mxu0 %v1084
  %1132 = vmatprep.subr.bf16.mxu0 %v1083
  %1133 = vmatpush1.bf16.msra.mxu0 %v1082
  %1134 = vmatprep.subr.bf16.mxu0 0
  %1135 = vmatpush2.bf16.msra.mxu0 0
  %1136 = vmatprep.subr.bf16.mxu0 0
  %1137 = vmatpush2.bf16.msra.mxu0 0
  %1138 = vmatprep.subr.bf16.mxu0 0
  %1139 = vmatpush2.bf16.msra.mxu0 0
  %1140 = vmatprep.subr.bf16.mxu0 0
  %1141 = vmatpush2.bf16.msra.mxu0 0
  %1142 = vmatprep.subr.bf16.mxu0 0
  %1143 = vmatpush2.bf16.msra.mxu0 0
  %1144 = vmatprep.subr.bf16.mxu0 0
  %1145 = vmatpush2.bf16.msra.mxu0 0
  %1146 = vmatprep.subr.bf16.mxu0 0
  %1147 = vmatpush2.bf16.msra.mxu0 0
  %1148 = vmatprep.subr.bf16.mxu0 %v1099
  %1149 = vmatpush2.bf16.msra.mxu0 %v1098
  %1150 = vmatprep.mubr.bf16.mxu0 %v574
  %1151 = vmatmul.mubr.bf16.gmra.mxu0 %v480
  %v1152 = vpop.f32.mrf.mxu0
  %v1153 = vadd.f32 %v467, %v1152
  %v1154 = vpop.f32.mrf.mxu0
  %v1155 = vadd.f32 %v467, %v1154
  %v1156 = vpop.f32.mrf.mxu0
  %v1157 = vadd.f32 %v472, %v1156
  %v1158 = vpop.f32.mrf.mxu0
  %v1159 = vadd.f32 %v472, %v1158
  %1160 = vdwg.mxu0
  %v1161 = vmax.f32 %v1153, 0.0
  %v1162 = vmax.f32 %v1155, 0.0
  %v1163 = vmax.f32 %v1157, 0.0
  %v1164 = vmax.f32 %v1159, 0.0
  %v1165 = vpack.c.bf16 %v1163, %v1161
  %v1166 = vpack.c.bf16 %v1164, %v1162
  %1167 = vmatprep.subr.bf16.mxu0 0
  %1168 = vmatpush1.bf16.msra.mxu0 0
  %1169 = vmatprep.subr.bf16.mxu0 0
  %1170 = vmatpush1.bf16.msra.mxu0 0
  %1171 = vmatprep.subr.bf16.mxu0 0
  %1172 = vmatpush1.bf16.msra.mxu0 0
  %1173 = vmatprep.subr.bf16.mxu0 0
  %1174 = vmatpush1.bf16.msra.mxu0 0
  %1175 = vmatprep.subr.bf16.mxu0 0
  %1176 = vmatpush1.bf16.msra.mxu0 0
  %1177 = vmatprep.subr.bf16.mxu0 0
  %1178 = vmatpush1.bf16.msra.mxu0 0
  %1179 = vmatprep.subr.bf16.mxu0 0
  %1180 = vmatpush1.bf16.msra.mxu0 0
  %1181 = vmatprep.subr.bf16.mxu0 %v1166
  %1182 = vmatpush1.bf16.msra.mxu0 %v1165
  %1183 = vmatprep.subr.bf16.mxu0 0
  %1184 = vmatpush2.bf16.msra.mxu0 0
  %1185 = vmatprep.subr.bf16.mxu0 0
  %1186 = vmatpush2.bf16.msra.mxu0 0
  %1187 = vmatprep.subr.bf16.mxu0 0
  %1188 = vmatpush2.bf16.msra.mxu0 0
  %1189 = vmatprep.subr.bf16.mxu0 0
  %1190 = vmatpush2.bf16.msra.mxu0 0
  %1191 = vmatprep.subr.bf16.mxu0 0
  %1192 = vmatpush2.bf16.msra.mxu0 0
  %1193 = vmatprep.subr.bf16.mxu0 0
  %1194 = vmatpush2.bf16.msra.mxu0 0
  %1195 = vmatprep.subr.bf16.mxu0 0
  %1196 = vmatpush2.bf16.msra.mxu0 0
  %1197 = vmatprep.subr.bf16.mxu0 0
  %1198 = vmatpush2.bf16.msra.mxu0 0
  %1199 = vmatprep.mubr.bf16.mxu0 0
  %1200 = vmatmul.mubr.bf16.gmra.mxu0 %v641
  %v1201 = vpop.f32.mrf.mxu0
  %v1202 = vadd.f32 %v628, %v1201
  %v1203 = vpop.f32.mrf.mxu0
  %v1204 = vadd.f32 %v628, %v1203
  %v1205 = vpop.f32.mrf.mxu0
  %v1206 = vadd.f32 %v633, %v1205
  %v1207 = vpop.f32.mrf.mxu0
  %v1208 = vadd.f32 %v633, %v1207
  %1209 = vdwg.mxu0
  %v1210 = vld [vmem:[%s702] sm:$0xff]
  %v1211 = vld [vmem:[%s702 + $0x8] sm:$0xff]
  %v1212 = vld [vmem:[%s702 + $0x10] sm:$0xff]
  %v1213 = vld [vmem:[%s702 + $0x18] sm:$0xff]
  %v1214 = vadd.f32 %v1202, %v1210
  %v1215 = vadd.f32 %v1204, %v1211
  %v1216 = vadd.f32 %v1206, %v1212
  %v1217 = vadd.f32 %v1208, %v1213
  %v1218 = vmax.f32 %v1214, 0.0
  %v1219 = vmax.f32 %v1215, 0.0
  %v1220 = vmax.f32 %v1216, 0.0
  %v1221 = vmax.f32 %v1217, 0.0
  %s1222 = scalar_lea.vmem %s8, 32
  %1223 = vst [vmem:[%s1222] sm:$0xff] %v1218
  %1224 = vst [vmem:[%s1222 + $0x8] sm:$0xff] %v1219
  %1225 = vst [vmem:[%s1222 + $0x10] sm:$0xff] %v1220
  %1226 = vst [vmem:[%s1222 + $0x18] sm:$0xff] %v1221
  // Predicated region
  $region34: #{_lambda_.1} parent=0 // pred_check
    _
  $region35: #{_lambda_.1} parent=0 // pred_check_branch
    %1228 = sbr.rel (0) target = $region37
  $region36: #{_lambda_.1} parent=0 // pred_region
    _
  $region37: #{_lambda_.1} parent=0 // pred_fallthru
    _
  // Predicated region
  $region38: #{_lambda_.1} parent=0 // pred_check
    _
  $region39: #{_lambda_.1} parent=0 // pred_check_branch
    %1230 = sbr.rel (0) target = $region41
  $region40: #{_lambda_.1} parent=0 // pred_region
    _
  $region41: #{_lambda_.1} parent=0 // pred_fallthru
    _

</llo_original>
